<compile_context>
chip_gen: v7x
topology: tpu7x:2x2x1
jax: 0.10.0
libtpu: 0.0.40
codegen_flags: <defaults>
</compile_context>

<pallas_src>
import functools

import jax
import jax.numpy as jnp
from jax.experimental import pallas as pl
from jax.experimental.pallas import tpu as pltpu


# ---------------------------------------------------------------------------
# Activations (shared by kernel and reference so semantics match the module).
# ---------------------------------------------------------------------------
def _sigmoid(y):
    return 1.0 / (1.0 + jnp.exp(-y))


def _apply_activation(y, name):
    if name == "none":
        return y
    if name == "relu":
        return jnp.maximum(y, 0.0)
    if name == "silu":
        return y * _sigmoid(y)
    if name == "leaky_relu":                       # PyTorch default slope 0.01
        return jnp.where(y >= 0.0, y, 0.01 * y)
    if name == "softplus":                         # PyTorch beta=1, threshold=20
        return jnp.where(y > 20.0, y, jnp.log(1.0 + jnp.exp(jnp.minimum(y, 20.0))))
    if name == "sigmoid":
        return _sigmoid(y)
    if name == "tanh":
        return jnp.tanh(y)
    raise ValueError(f"unknown activation: {name}")


# ---------------------------------------------------------------------------
# Fused whole-MLP kernel: chained (matmul -> bias -> [LayerNorm] -> act) per
# row tile.  Params are tiny and VMEM-resident; intermediates never hit HBM.
# ---------------------------------------------------------------------------
def _mlp_fused_kernel(x_ref, *refs, n_layers, layer_norm, activation,
                      last_activation, eps):
    o_ref = refs[-1]
    p = refs[:-1]

    y = x_ref[...].astype(jnp.float32)            # [TM, K0]
    idx = 0
    for li in range(n_layers):
        w = p[idx][...]                            # [K_li, N_li]
        b = p[idx + 1][...]                        # [1, N_li]
        idx += 2
        # Default precision: native bf16 MXU passes, f32 accumulate.
        y = jnp.dot(y, w, preferred_element_type=jnp.float32) + b
        is_last = li == n_layers - 1
        if (not is_last) and layer_norm:
            g = p[idx][...]                        # [1, N_li]
            beta = p[idx + 1][...]                 # [1, N_li]
            idx += 2
            mean = jnp.mean(y, axis=-1, keepdims=True)
            cent = y - mean
            var = jnp.mean(cent * cent, axis=-1, keepdims=True)
            y = cent * jax.lax.rsqrt(var + eps) * g + beta
        y = _apply_activation(y, last_activation if is_last else activation)

    o_ref[...] = y.astype(o_ref.dtype)


def _round_up(x, m):
    return ((x + m - 1) // m) * m


# ---------------------------------------------------------------------------
# MLP forward, matching the PyTorch module order per layer:
#   Linear -> [LayerNorm] -> [Dropout] -> activation     (hidden layers)
#   Linear -> last_activation                            (last layer)
# Weights are stored as [in_dim, out_dim] (i.e. PyTorch weight transposed).
# ---------------------------------------------------------------------------
def mlp_forward(x, params, *, activation="relu", last_activation="none",
                layer_norm=False, dropout=0.0, eps=1e-5, max_tile_m=512):
    # TODO(synk): training-mode nn.Dropout (stochastic masking) is not
    # implemented; this matches nn.Dropout in eval mode (identity).
    del dropout

    orig_shape = x.shape
    x2 = x.reshape(-1, orig_shape[-1]).astype(jnp.float32)
    m, k0 = x2.shape

    weights = params["weights"]
    biases = params["biases"]
    n_layers = len(weights)
    n_last = weights[-1].shape[1]

    # Row tile: multiple of 8 (sublane), >= 2 grid steps when m > 8 so both
    # v7x TensorCores get work, capped at max_tile_m for VMEM headroom.
    tile_m = min(max_tile_m, max(8, _round_up(pl.cdiv(m, 2), 8)))
    grid = (pl.cdiv(m, tile_m),)

    in_arrays = [x2]
    in_specs = [pl.BlockSpec((tile_m, k0), lambda i: (i, 0))]
    for li in range(n_layers):
        w = weights[li].astype(jnp.float32)
        b = biases[li].astype(jnp.float32).reshape(1, -1)
        kin, nout = w.shape
        in_arrays += [w, b]
        in_specs += [
            pl.BlockSpec((kin, nout), lambda i: (0, 0)),   # full weight, resident
            pl.BlockSpec((1, nout), lambda i: (0, 0)),     # full bias row
        ]
        if (li < n_layers - 1) and layer_norm:
            g = params["ln_gamma"][li].astype(jnp.float32).reshape(1, -1)
            be = params["ln_beta"][li].astype(jnp.float32).reshape(1, -1)
            in_arrays += [g, be]
            in_specs += [
                pl.BlockSpec((1, nout), lambda i: (0, 0)),
                pl.BlockSpec((1, nout), lambda i: (0, 0)),
            ]

    kernel = functools.partial(
        _mlp_fused_kernel,
        n_layers=n_layers, layer_norm=layer_norm,
        activation=activation, last_activation=last_activation,
        eps=float(eps))

    out = pl.pallas_call(
        kernel,
        out_shape=jax.ShapeDtypeStruct((m, n_last), jnp.float32),
        grid_spec=pltpu.PrefetchScalarGridSpec(
            num_scalar_prefetch=0,
            grid=grid,
            in_specs=in_specs,
            out_specs=pl.BlockSpec((tile_m, n_last), lambda i: (i, 0)),
        ),
        compiler_params=pltpu.CompilerParams(
            dimension_semantics=("parallel",)),
    )(*in_arrays)

    return out.reshape(orig_shape[:-1] + (n_last,))


# ---------------------------------------------------------------------------
# Pure-JAX golden reference (full-precision f32 matmuls), mirrors the module.
# ---------------------------------------------------------------------------
def _mlp_ref(x, params, *, activation, last_activation, layer_norm, eps=1e-5):
    x = x.astype(jnp.float32)
    n_layers = len(params["weights"])
    for i in range(n_layers):
        w, b = params["weights"][i], params["biases"][i]
        y = jnp.dot(x, w, precision=jax.lax.Precision.HIGHEST) + b
        is_last = (i == n_layers - 1)
        if (not is_last) and layer_norm:
            g, be = params["ln_gamma"][i], params["ln_beta"][i]
            mean = jnp.mean(y, axis=-1, keepdims=True)
            cent = y - mean
            var = jnp.mean(cent * cent, axis=-1, keepdims=True)
            y = cent * jax.lax.rsqrt(var + eps) * g + be
        x = _apply_activation(y, last_activation if is_last else activation)
    return x


# ---------------------------------------------------------------------------
# Demo / self-test.
# ---------------------------------------------------------------------------
if __name__ == "__main__":
    key = jax.random.PRNGKey(0)

    DIMS = (32, 64, 64, 16)          # MLP dims
    BATCH = 200                      # not a multiple of the row tile: exercises
                                     # the masked partial tail block
    ACT, LAST_ACT = "silu", "tanh"
    LAYER_NORM = True

    n_layers = len(DIMS) - 1
    keys = jax.random.split(key, 2 * n_layers + 1)
    x_key, p_keys = keys[0], keys[1:]

    weights, biases, ln_gamma, ln_beta = [], [], [], []
    for i in range(n_layers):
        fan_in, fan_out = DIMS[i], DIMS[i + 1]
        w = jax.random.normal(p_keys[2 * i], (fan_in, fan_out),
                              jnp.float32) * (1.0 / fan_in ** 0.5)
        bvec = jax.random.normal(p_keys[2 * i + 1], (fan_out,),
                                 jnp.float32) * 0.01
        weights.append(w)
        biases.append(bvec)
        ln_gamma.append(jnp.ones((fan_out,), jnp.float32))
        ln_beta.append(jnp.zeros((fan_out,), jnp.float32))
    params = dict(weights=weights, biases=biases,
                  ln_gamma=ln_gamma, ln_beta=ln_beta)

    x = jax.random.normal(x_key, (BATCH, DIMS[0]), jnp.float32)

    out = mlp_forward(x, params, activation=ACT, last_activation=LAST_ACT,
                      layer_norm=LAYER_NORM, dropout=0.0)
    out = jax.block_until_ready(out)

    ref = _mlp_ref(x, params, activation=ACT, last_activation=LAST_ACT,
                   layer_norm=LAYER_NORM)

    assert out.shape == (BATCH, DIMS[-1]), out.shape
    # Tolerance budget: kernel matmuls run at default precision (bf16 MXU
    # passes, f32 accumulate) vs an f32-HIGHEST golden; across 3 small layers
    # the expected max abs error is O(1e-2) on tanh-bounded outputs.
    max_err = float(jnp.max(jnp.abs(out - ref)))
    assert jnp.allclose(out, ref, atol=5e-2, rtol=5e-2), max_err

    print("KERNEL_OK")
</pallas_src>

<mosaic_0001>
module attributes {stable_mosaic.version = 11 : i64} {
  func.func @_mlp_fused_kernel(%arg0: i32, %arg1: memref<104x32xf32, #tpu.memory_space<vmem>>, %arg2: memref<32x64xf32, #tpu.memory_space<vmem>>, %arg3: memref<1x64xf32, #tpu.memory_space<vmem>>, %arg4: memref<1x64xf32, #tpu.memory_space<vmem>>, %arg5: memref<1x64xf32, #tpu.memory_space<vmem>>, %arg6: memref<64x64xf32, #tpu.memory_space<vmem>>, %arg7: memref<1x64xf32, #tpu.memory_space<vmem>>, %arg8: memref<1x64xf32, #tpu.memory_space<vmem>>, %arg9: memref<1x64xf32, #tpu.memory_space<vmem>>, %arg10: memref<64x16xf32, #tpu.memory_space<vmem>>, %arg11: memref<1x16xf32, #tpu.memory_space<vmem>>, %arg12: memref<104x16xf32, #tpu.memory_space<vmem>>) attributes {dimension_semantics = [#tpu.dimension_semantics<parallel>], iteration_bounds = array<i64: 2>, scalar_prefetch = 0 : i64, scratch_operands = 0 : i64, tpu.core_type = #tpu.core_type<tc>, window_params = [{transform_indices = @transform_0, window_bounds = array<i64: 104, 32>}, {pipeline_mode = #tpu.pipeline_mode<synchronous>, transform_indices = @transform_1, window_bounds = array<i64: 32, 64>}, {pipeline_mode = #tpu.pipeline_mode<synchronous>, transform_indices = @transform_2, window_bounds = array<i64: 1, 64>}, {pipeline_mode = #tpu.pipeline_mode<synchronous>, transform_indices = @transform_3, window_bounds = array<i64: 1, 64>}, {pipeline_mode = #tpu.pipeline_mode<synchronous>, transform_indices = @transform_4, window_bounds = array<i64: 1, 64>}, {pipeline_mode = #tpu.pipeline_mode<synchronous>, transform_indices = @transform_5, window_bounds = array<i64: 64, 64>}, {pipeline_mode = #tpu.pipeline_mode<synchronous>, transform_indices = @transform_6, window_bounds = array<i64: 1, 64>}, {pipeline_mode = #tpu.pipeline_mode<synchronous>, transform_indices = @transform_7, window_bounds = array<i64: 1, 64>}, {pipeline_mode = #tpu.pipeline_mode<synchronous>, transform_indices = @transform_8, window_bounds = array<i64: 1, 64>}, {pipeline_mode = #tpu.pipeline_mode<synchronous>, transform_indices = @transform_9, window_bounds = array<i64: 64, 16>}, {pipeline_mode = #tpu.pipeline_mode<synchronous>, transform_indices = @transform_10, window_bounds = array<i64: 1, 16>}, {transform_indices = @transform_11, window_bounds = array<i64: 104, 16>}]} {
    %c0 = arith.constant 0 : index
    %c0_0 = arith.constant 0 : index
    %0 = vector.load %arg1[%c0, %c0_0] : memref<104x32xf32, #tpu.memory_space<vmem>>, vector<104x32xf32>
    %c0_1 = arith.constant 0 : index
    %c0_2 = arith.constant 0 : index
    %1 = vector.load %arg2[%c0_1, %c0_2] : memref<32x64xf32, #tpu.memory_space<vmem>>, vector<32x64xf32>
    %c0_3 = arith.constant 0 : index
    %c0_4 = arith.constant 0 : index
    %2 = vector.load %arg3[%c0_3, %c0_4] : memref<1x64xf32, #tpu.memory_space<vmem>>, vector<1x64xf32>
    %cst = arith.constant dense<0.000000e+00> : vector<104x64xf32>
    %3 = tpu.matmul %0, %1, %cst {dimension_numbers = #tpu.dot_dimension_numbers<[1], [0], [0], [1], [0, 0, 1, 1], [], []>} : vector<104x32xf32>, vector<32x64xf32>, vector<104x64xf32> -> vector<104x64xf32>
    %4 = vector.broadcast %2 : vector<1x64xf32> to vector<104x64xf32>
    %5 = arith.addf %3, %4 : vector<104x64xf32>
    %c0_5 = arith.constant 0 : index
    %c0_6 = arith.constant 0 : index
    %6 = vector.load %arg4[%c0_5, %c0_6] : memref<1x64xf32, #tpu.memory_space<vmem>>, vector<1x64xf32>
    %c0_7 = arith.constant 0 : index
    %c0_8 = arith.constant 0 : index
    %7 = vector.load %arg5[%c0_7, %c0_8] : memref<1x64xf32, #tpu.memory_space<vmem>>, vector<1x64xf32>
    %cst_9 = arith.constant dense<0.000000e+00> : vector<104xf32>
    %8 = vector.multi_reduction <add>, %5, %cst_9 [1] : vector<104x64xf32> to vector<104xf32>
    %9 = vector.shape_cast %8 : vector<104xf32> to vector<104x1xf32>
    %cst_10 = arith.constant 6.400000e+01 : f32
    %10 = vector.broadcast %cst_10 : f32 to vector<104x1xf32>
    %11 = arith.divf %9, %10 : vector<104x1xf32>
    %12 = vector.broadcast %11 : vector<104x1xf32> to vector<104x64xf32>
    %13 = arith.subf %5, %12 : vector<104x64xf32>
    %14 = arith.mulf %13, %13 : vector<104x64xf32>
    %cst_11 = arith.constant dense<0.000000e+00> : vector<104xf32>
    %15 = vector.multi_reduction <add>, %14, %cst_11 [1] : vector<104x64xf32> to vector<104xf32>
    %16 = vector.shape_cast %15 : vector<104xf32> to vector<104x1xf32>
    %cst_12 = arith.constant 6.400000e+01 : f32
    %17 = vector.broadcast %cst_12 : f32 to vector<104x1xf32>
    %18 = arith.divf %16, %17 : vector<104x1xf32>
    %cst_13 = arith.constant 9.99999974E-6 : f32
    %19 = vector.broadcast %cst_13 : f32 to vector<104x1xf32>
    %20 = arith.addf %18, %19 : vector<104x1xf32>
    %21 = math.rsqrt %20 : vector<104x1xf32>
    %22 = vector.broadcast %21 : vector<104x1xf32> to vector<104x64xf32>
    %23 = arith.mulf %13, %22 : vector<104x64xf32>
    %24 = vector.broadcast %6 : vector<1x64xf32> to vector<104x64xf32>
    %25 = arith.mulf %23, %24 : vector<104x64xf32>
    %26 = vector.broadcast %7 : vector<1x64xf32> to vector<104x64xf32>
    %27 = arith.addf %25, %26 : vector<104x64xf32>
    %cst_14 = arith.constant 0.000000e+00 : f32
    %28 = vector.broadcast %cst_14 : f32 to vector<104x64xf32>
    %29 = arith.subf %28, %27 : vector<104x64xf32>
    %30 = math.exp %29 : vector<104x64xf32>
    %cst_15 = arith.constant 1.000000e+00 : f32
    %31 = vector.broadcast %cst_15 : f32 to vector<104x64xf32>
    %32 = arith.addf %31, %30 : vector<104x64xf32>
    %cst_16 = arith.constant 1.000000e+00 : f32
    %33 = vector.broadcast %cst_16 : f32 to vector<104x64xf32>
    %34 = arith.divf %33, %32 : vector<104x64xf32>
    %35 = arith.mulf %27, %34 : vector<104x64xf32>
    %c0_17 = arith.constant 0 : index
    %c0_18 = arith.constant 0 : index
    %36 = vector.load %arg6[%c0_17, %c0_18] : memref<64x64xf32, #tpu.memory_space<vmem>>, vector<64x64xf32>
    %c0_19 = arith.constant 0 : index
    %c0_20 = arith.constant 0 : index
    %37 = vector.load %arg7[%c0_19, %c0_20] : memref<1x64xf32, #tpu.memory_space<vmem>>, vector<1x64xf32>
    %cst_21 = arith.constant dense<0.000000e+00> : vector<104x64xf32>
    %38 = tpu.matmul %35, %36, %cst_21 {dimension_numbers = #tpu.dot_dimension_numbers<[1], [0], [0], [1], [0, 0, 1, 1], [], []>} : vector<104x64xf32>, vector<64x64xf32>, vector<104x64xf32> -> vector<104x64xf32>
    %39 = vector.broadcast %37 : vector<1x64xf32> to vector<104x64xf32>
    %40 = arith.addf %38, %39 : vector<104x64xf32>
    %c0_22 = arith.constant 0 : index
    %c0_23 = arith.constant 0 : index
    %41 = vector.load %arg8[%c0_22, %c0_23] : memref<1x64xf32, #tpu.memory_space<vmem>>, vector<1x64xf32>
    %c0_24 = arith.constant 0 : index
    %c0_25 = arith.constant 0 : index
    %42 = vector.load %arg9[%c0_24, %c0_25] : memref<1x64xf32, #tpu.memory_space<vmem>>, vector<1x64xf32>
    %cst_26 = arith.constant dense<0.000000e+00> : vector<104xf32>
    %43 = vector.multi_reduction <add>, %40, %cst_26 [1] : vector<104x64xf32> to vector<104xf32>
    %44 = vector.shape_cast %43 : vector<104xf32> to vector<104x1xf32>
    %cst_27 = arith.constant 6.400000e+01 : f32
    %45 = vector.broadcast %cst_27 : f32 to vector<104x1xf32>
    %46 = arith.divf %44, %45 : vector<104x1xf32>
    %47 = vector.broadcast %46 : vector<104x1xf32> to vector<104x64xf32>
    %48 = arith.subf %40, %47 : vector<104x64xf32>
    %49 = arith.mulf %48, %48 : vector<104x64xf32>
    %cst_28 = arith.constant dense<0.000000e+00> : vector<104xf32>
    %50 = vector.multi_reduction <add>, %49, %cst_28 [1] : vector<104x64xf32> to vector<104xf32>
    %51 = vector.shape_cast %50 : vector<104xf32> to vector<104x1xf32>
    %cst_29 = arith.constant 6.400000e+01 : f32
    %52 = vector.broadcast %cst_29 : f32 to vector<104x1xf32>
    %53 = arith.divf %51, %52 : vector<104x1xf32>
    %cst_30 = arith.constant 9.99999974E-6 : f32
    %54 = vector.broadcast %cst_30 : f32 to vector<104x1xf32>
    %55 = arith.addf %53, %54 : vector<104x1xf32>
    %56 = math.rsqrt %55 : vector<104x1xf32>
    %57 = vector.broadcast %56 : vector<104x1xf32> to vector<104x64xf32>
    %58 = arith.mulf %48, %57 : vector<104x64xf32>
    %59 = vector.broadcast %41 : vector<1x64xf32> to vector<104x64xf32>
    %60 = arith.mulf %58, %59 : vector<104x64xf32>
    %61 = vector.broadcast %42 : vector<1x64xf32> to vector<104x64xf32>
    %62 = arith.addf %60, %61 : vector<104x64xf32>
    %cst_31 = arith.constant 0.000000e+00 : f32
    %63 = vector.broadcast %cst_31 : f32 to vector<104x64xf32>
    %64 = arith.subf %63, %62 : vector<104x64xf32>
    %65 = math.exp %64 : vector<104x64xf32>
    %cst_32 = arith.constant 1.000000e+00 : f32
    %66 = vector.broadcast %cst_32 : f32 to vector<104x64xf32>
    %67 = arith.addf %66, %65 : vector<104x64xf32>
    %cst_33 = arith.constant 1.000000e+00 : f32
    %68 = vector.broadcast %cst_33 : f32 to vector<104x64xf32>
    %69 = arith.divf %68, %67 : vector<104x64xf32>
    %70 = arith.mulf %62, %69 : vector<104x64xf32>
    %c0_34 = arith.constant 0 : index
    %c0_35 = arith.constant 0 : index
    %71 = vector.load %arg10[%c0_34, %c0_35] : memref<64x16xf32, #tpu.memory_space<vmem>>, vector<64x16xf32>
    %c0_36 = arith.constant 0 : index
    %c0_37 = arith.constant 0 : index
    %72 = vector.load %arg11[%c0_36, %c0_37] : memref<1x16xf32, #tpu.memory_space<vmem>>, vector<1x16xf32>
    %cst_38 = arith.constant dense<0.000000e+00> : vector<104x16xf32>
    %73 = tpu.matmul %70, %71, %cst_38 {dimension_numbers = #tpu.dot_dimension_numbers<[1], [0], [0], [1], [0, 0, 1, 1], [], []>} : vector<104x64xf32>, vector<64x16xf32>, vector<104x16xf32> -> vector<104x16xf32>
    %74 = vector.broadcast %72 : vector<1x16xf32> to vector<104x16xf32>
    %75 = arith.addf %73, %74 : vector<104x16xf32>
    %76 = math.tanh %75 : vector<104x16xf32>
    %c0_39 = arith.constant 0 : index
    %c0_40 = arith.constant 0 : index
    %77 = vector.load %arg12[%c0_39, %c0_40] : memref<104x16xf32, #tpu.memory_space<vmem>>, vector<104x16xf32>
    tpu.vector_store %arg12[%c0_39, %c0_40], %76 {strides = array<i32>} : memref<104x16xf32, #tpu.memory_space<vmem>>, vector<104x16xf32>,
    return
  }
  func.func @transform_0(%arg0: i32) -> (i32, i32) {
    %c0_i32 = arith.constant 0 : i32
    %c0_i32_0 = arith.constant 0 : i32
    return %arg0, %c0_i32 : i32, i32
  }
  func.func @transform_1(%arg0: i32) -> (i32, i32) {
    %c0_i32 = arith.constant 0 : i32
    %c0_i32_0 = arith.constant 0 : i32
    %c0_i32_1 = arith.constant 0 : i32
    return %c0_i32, %c0_i32_0 : i32, i32
  }
  func.func @transform_2(%arg0: i32) -> (i32, i32) {
    %c0_i32 = arith.constant 0 : i32
    %c0_i32_0 = arith.constant 0 : i32
    %c0_i32_1 = arith.constant 0 : i32
    return %c0_i32, %c0_i32_0 : i32, i32
  }
  func.func @transform_3(%arg0: i32) -> (i32, i32) {
    %c0_i32 = arith.constant 0 : i32
    %c0_i32_0 = arith.constant 0 : i32
    %c0_i32_1 = arith.constant 0 : i32
    return %c0_i32, %c0_i32_0 : i32, i32
  }
  func.func @transform_4(%arg0: i32) -> (i32, i32) {
    %c0_i32 = arith.constant 0 : i32
    %c0_i32_0 = arith.constant 0 : i32
    %c0_i32_1 = arith.constant 0 : i32
    return %c0_i32, %c0_i32_0 : i32, i32
  }
  func.func @transform_5(%arg0: i32) -> (i32, i32) {
    %c0_i32 = arith.constant 0 : i32
    %c0_i32_0 = arith.constant 0 : i32
    %c0_i32_1 = arith.constant 0 : i32
    return %c0_i32, %c0_i32_0 : i32, i32
  }
  func.func @transform_6(%arg0: i32) -> (i32, i32) {
    %c0_i32 = arith.constant 0 : i32
    %c0_i32_0 = arith.constant 0 : i32
    %c0_i32_1 = arith.constant 0 : i32
    return %c0_i32, %c0_i32_0 : i32, i32
  }
  func.func @transform_7(%arg0: i32) -> (i32, i32) {
    %c0_i32 = arith.constant 0 : i32
    %c0_i32_0 = arith.constant 0 : i32
    %c0_i32_1 = arith.constant 0 : i32
    return %c0_i32, %c0_i32_0 : i32, i32
  }
  func.func @transform_8(%arg0: i32) -> (i32, i32) {
    %c0_i32 = arith.constant 0 : i32
    %c0_i32_0 = arith.constant 0 : i32
    %c0_i32_1 = arith.constant 0 : i32
    return %c0_i32, %c0_i32_0 : i32, i32
  }
  func.func @transform_9(%arg0: i32) -> (i32, i32) {
    %c0_i32 = arith.constant 0 : i32
    %c0_i32_0 = arith.constant 0 : i32
    %c0_i32_1 = arith.constant 0 : i32
    return %c0_i32, %c0_i32_0 : i32, i32
  }
  func.func @transform_10(%arg0: i32) -> (i32, i32) {
    %c0_i32 = arith.constant 0 : i32
    %c0_i32_0 = arith.constant 0 : i32
    %c0_i32_1 = arith.constant 0 : i32
    return %c0_i32, %c0_i32_0 : i32, i32
  }
  func.func @transform_11(%arg0: i32) -> (i32, i32) {
    %c0_i32 = arith.constant 0 : i32
    %c0_i32_0 = arith.constant 0 : i32
    return %arg0, %c0_i32 : i32, i32
  }
}

</mosaic_0001>

<llo_original>
// kernel: tpu_custom_call.1
$region0: #{tpu_custom_call.1}
  #allocation0 [shape = 'u32[]', space=smem, size = 0x4, offset = 0x4, fixed_abs, tag = 'smem constant byte address 0x4 - core index']
  #allocation1 [shape = 'u32[144,128]{1,0:T(1,128)}', space=vmem, size = 0x12000, scoped, tag = 'internal scratch']
  %s0 = inlined_call_operand.vmem [shape: f32[200,32], index: 0, kind: input, shape index: {}]
  %s1 = inlined_call_operand.vmem [shape: f32[32,64], index: 1, kind: input, shape index: {}]
  %s2 = inlined_call_operand.vmem [shape: f32[1,64], index: 2, kind: input, shape index: {}]
  %s3 = inlined_call_operand.vmem [shape: f32[1,64], index: 3, kind: input, shape index: {}]
  %s4 = inlined_call_operand.vmem [shape: f32[1,64], index: 4, kind: input, shape index: {}]
  %s5 = inlined_call_operand.vmem [shape: f32[64,64], index: 5, kind: input, shape index: {}]
  %s6 = inlined_call_operand.vmem [shape: f32[1,64], index: 6, kind: input, shape index: {}]
  %s7 = inlined_call_operand.vmem [shape: f32[1,64], index: 7, kind: input, shape index: {}]
  %s8 = inlined_call_operand.vmem [shape: f32[1,64], index: 8, kind: input, shape index: {}]
  %s9 = inlined_call_operand.vmem [shape: f32[64,16], index: 9, kind: input, shape index: {}]
  %s10 = inlined_call_operand.vmem [shape: f32[1,16], index: 10, kind: input, shape index: {}]
  %s11 = inlined_call_operand.vmem [shape: f32[200,16], index: 11, kind: output, shape index: {}]
  %s12 = sld [smem:[#allocation0]]
  $region125: #{tpu_custom_call.1} parent=0
    _
  %s14 = ssub.s32 1, %s12
  %s15 = scalar_select 0, %s14, %s12
  $region1: #{tpu_custom_call.1} parent=0
    #allocation2 [shape = 'u8[106496]{0}', space=vmem, size = 0x1a000, scoped, tag = 'output window, operand 0']
    loop: start=0, step=1, limit=4
    $region2: #{tpu_custom_call.1} parent=1 // loop_pre_header
      _
    $region3: #{tpu_custom_call.1} parent=1 // loop_header
      %s17 = sphi 0, %s21
      %p18 = scmp.ge.s32.totalorder %s17, 4
      %s27 = sphi 0, %s29
      %s30 = sphi 0, %s27
      %s31 = sphi 0, %s30
      %s47 = sphi 0, %s31
      %s51 = sphi 0, %s51
      %s53 = sphi 0, %s51
      %s54 = sphi 0, %s53
      %s68 = sphi 0, %s54
      %s72 = sphi 0, %s72
      %s74 = sphi 0, %s72
      %s75 = sphi 0, %s74
      %s89 = sphi 0, %s75
      %s93 = sphi 0, %s93
      %s95 = sphi 0, %s93
      %s96 = sphi 0, %s95
      %s110 = sphi 0, %s96
      %s114 = sphi 0, %s114
      %s116 = sphi 0, %s114
      %s117 = sphi 0, %s116
      %s131 = sphi 0, %s117
      %s135 = sphi 0, %s135
      %s137 = sphi 0, %s135
      %s138 = sphi 0, %s137
      %s152 = sphi 0, %s138
      %s156 = sphi 0, %s156
      %s158 = sphi 0, %s156
      %s159 = sphi 0, %s158
      %s173 = sphi 0, %s159
      %s177 = sphi 0, %s177
      %s179 = sphi 0, %s177
      %s180 = sphi 0, %s179
      %s194 = sphi 0, %s180
      %s198 = sphi 0, %s198
      %s200 = sphi 0, %s198
      %s201 = sphi 0, %s200
      %s215 = sphi 0, %s201
      %s219 = sphi 0, %s219
      %s221 = sphi 0, %s219
      %s222 = sphi 0, %s221
      %s236 = sphi 0, %s222
      %s240 = sphi 0, %s240
      %s242 = sphi 0, %s240
      %s243 = sphi 0, %s242
      %s257 = sphi 0, %s243
      %s263 = sphi 0, %s265
      %s266 = sphi 0, %s263
      %s267 = sphi 0, %s266
      %s283 = sphi 0, %s267
    $region4: #{tpu_custom_call.1} parent=1 // loop_header_branch
      %20 = sbr.rel (%p18) target = $region8
    $region5: #{tpu_custom_call.1} parent=1 // loop_body
      %s22 = ssub.s32 %s17, 1
      %s23 = ssub.s32 %s17, 2
      %s24 = sadd.s32 %s17, 1
      %s25 = ssub.s32 %s17, %s24
      %p26 = scmp.eq.s32.totalorder %s25, 0
      %s28 = sadd.s32 %s27, 1
      %s29 = scalar_select %p26, %s27, %s28
      %p32 = pneg %p26
      %p33 = scmp.eq.s32.totalorder %s17, 1
      %p34 = por %p32, %p33
      %p35 = scmp.ne.s32.totalorder %s27, %s30
      %p36 = scmp.eq.s32.totalorder %s17, 0
      %p37 = por %p35, %p36
      %p38 = scmp.ne.s32.totalorder %s27, %s30
      %p39 = scmp.eq.s32.totalorder %s22, 1
      %p40 = por %p38, %p39
      %p41 = scmp.ne.s32.totalorder %s30, %s31
      %p42 = scmp.eq.s32.totalorder %s22, 0
      %p43 = por %p41, %p42
      %p44 = scmp.ne.s32.totalorder %s30, %s31
      %p45 = scmp.eq.s32.totalorder %s23, 1
      %p46 = por %p44, %p45
      %p48 = scmp.ne.s32.totalorder %s31, %s47
      %p49 = scmp.eq.s32.totalorder %s23, 0
      %p50 = por %p48, %p49
      %s52 = sadd.s32 %s51, 1
      %p55 = scmp.eq.s32.totalorder %s17, 1
      %p56 = scmp.ne.s32.totalorder %s51, %s53
      %p57 = scmp.eq.s32.totalorder %s17, 0
      %p58 = por %p56, %p57
      %p59 = scmp.ne.s32.totalorder %s51, %s53
      %p60 = scmp.eq.s32.totalorder %s22, 1
      %p61 = por %p59, %p60
      %p62 = scmp.ne.s32.totalorder %s53, %s54
      %p63 = scmp.eq.s32.totalorder %s22, 0
      %p64 = por %p62, %p63
      %p65 = scmp.ne.s32.totalorder %s53, %s54
      %p66 = scmp.eq.s32.totalorder %s23, 1
      %p67 = por %p65, %p66
      %p69 = scmp.ne.s32.totalorder %s54, %s68
      %p70 = scmp.eq.s32.totalorder %s23, 0
      %p71 = por %p69, %p70
      %s73 = sadd.s32 %s72, 1
      %p76 = scmp.eq.s32.totalorder %s17, 1
      %p77 = scmp.ne.s32.totalorder %s72, %s74
      %p78 = scmp.eq.s32.totalorder %s17, 0
      %p79 = por %p77, %p78
      %p80 = scmp.ne.s32.totalorder %s72, %s74
      %p81 = scmp.eq.s32.totalorder %s22, 1
      %p82 = por %p80, %p81
      %p83 = scmp.ne.s32.totalorder %s74, %s75
      %p84 = scmp.eq.s32.totalorder %s22, 0
      %p85 = por %p83, %p84
      %p86 = scmp.ne.s32.totalorder %s74, %s75
      %p87 = scmp.eq.s32.totalorder %s23, 1
      %p88 = por %p86, %p87
      %p90 = scmp.ne.s32.totalorder %s75, %s89
      %p91 = scmp.eq.s32.totalorder %s23, 0
      %p92 = por %p90, %p91
      %s94 = sadd.s32 %s93, 1
      %p97 = scmp.eq.s32.totalorder %s17, 1
      %p98 = scmp.ne.s32.totalorder %s93, %s95
      %p99 = scmp.eq.s32.totalorder %s17, 0
      %p100 = por %p98, %p99
      %p101 = scmp.ne.s32.totalorder %s93, %s95
      %p102 = scmp.eq.s32.totalorder %s22, 1
      %p103 = por %p101, %p102
      %p104 = scmp.ne.s32.totalorder %s95, %s96
      %p105 = scmp.eq.s32.totalorder %s22, 0
      %p106 = por %p104, %p105
      %p107 = scmp.ne.s32.totalorder %s95, %s96
      %p108 = scmp.eq.s32.totalorder %s23, 1
      %p109 = por %p107, %p108
      %p111 = scmp.ne.s32.totalorder %s96, %s110
      %p112 = scmp.eq.s32.totalorder %s23, 0
      %p113 = por %p111, %p112
      %s115 = sadd.s32 %s114, 1
      %p118 = scmp.eq.s32.totalorder %s17, 1
      %p119 = scmp.ne.s32.totalorder %s114, %s116
      %p120 = scmp.eq.s32.totalorder %s17, 0
      %p121 = por %p119, %p120
      %p122 = scmp.ne.s32.totalorder %s114, %s116
      %p123 = scmp.eq.s32.totalorder %s22, 1
      %p124 = por %p122, %p123
      %p125 = scmp.ne.s32.totalorder %s116, %s117
      %p126 = scmp.eq.s32.totalorder %s22, 0
      %p127 = por %p125, %p126
      %p128 = scmp.ne.s32.totalorder %s116, %s117
      %p129 = scmp.eq.s32.totalorder %s23, 1
      %p130 = por %p128, %p129
      %p132 = scmp.ne.s32.totalorder %s117, %s131
      %p133 = scmp.eq.s32.totalorder %s23, 0
      %p134 = por %p132, %p133
      %s136 = sadd.s32 %s135, 1
      %p139 = scmp.eq.s32.totalorder %s17, 1
      %p140 = scmp.ne.s32.totalorder %s135, %s137
      %p141 = scmp.eq.s32.totalorder %s17, 0
      %p142 = por %p140, %p141
      %p143 = scmp.ne.s32.totalorder %s135, %s137
      %p144 = scmp.eq.s32.totalorder %s22, 1
      %p145 = por %p143, %p144
      %p146 = scmp.ne.s32.totalorder %s137, %s138
      %p147 = scmp.eq.s32.totalorder %s22, 0
      %p148 = por %p146, %p147
      %p149 = scmp.ne.s32.totalorder %s137, %s138
      %p150 = scmp.eq.s32.totalorder %s23, 1
      %p151 = por %p149, %p150
      %p153 = scmp.ne.s32.totalorder %s138, %s152
      %p154 = scmp.eq.s32.totalorder %s23, 0
      %p155 = por %p153, %p154
      %s157 = sadd.s32 %s156, 1
      %p160 = scmp.eq.s32.totalorder %s17, 1
      %p161 = scmp.ne.s32.totalorder %s156, %s158
      %p162 = scmp.eq.s32.totalorder %s17, 0
      %p163 = por %p161, %p162
      %p164 = scmp.ne.s32.totalorder %s156, %s158
      %p165 = scmp.eq.s32.totalorder %s22, 1
      %p166 = por %p164, %p165
      %p167 = scmp.ne.s32.totalorder %s158, %s159
      %p168 = scmp.eq.s32.totalorder %s22, 0
      %p169 = por %p167, %p168
      %p170 = scmp.ne.s32.totalorder %s158, %s159
      %p171 = scmp.eq.s32.totalorder %s23, 1
      %p172 = por %p170, %p171
      %p174 = scmp.ne.s32.totalorder %s159, %s173
      %p175 = scmp.eq.s32.totalorder %s23, 0
      %p176 = por %p174, %p175
      %s178 = sadd.s32 %s177, 1
      %p181 = scmp.eq.s32.totalorder %s17, 1
      %p182 = scmp.ne.s32.totalorder %s177, %s179
      %p183 = scmp.eq.s32.totalorder %s17, 0
      %p184 = por %p182, %p183
      %p185 = scmp.ne.s32.totalorder %s177, %s179
      %p186 = scmp.eq.s32.totalorder %s22, 1
      %p187 = por %p185, %p186
      %p188 = scmp.ne.s32.totalorder %s179, %s180
      %p189 = scmp.eq.s32.totalorder %s22, 0
      %p190 = por %p188, %p189
      %p191 = scmp.ne.s32.totalorder %s179, %s180
      %p192 = scmp.eq.s32.totalorder %s23, 1
      %p193 = por %p191, %p192
      %p195 = scmp.ne.s32.totalorder %s180, %s194
      %p196 = scmp.eq.s32.totalorder %s23, 0
      %p197 = por %p195, %p196
      %s199 = sadd.s32 %s198, 1
      %p202 = scmp.eq.s32.totalorder %s17, 1
      %p203 = scmp.ne.s32.totalorder %s198, %s200
      %p204 = scmp.eq.s32.totalorder %s17, 0
      %p205 = por %p203, %p204
      %p206 = scmp.ne.s32.totalorder %s198, %s200
      %p207 = scmp.eq.s32.totalorder %s22, 1
      %p208 = por %p206, %p207
      %p209 = scmp.ne.s32.totalorder %s200, %s201
      %p210 = scmp.eq.s32.totalorder %s22, 0
      %p211 = por %p209, %p210
      %p212 = scmp.ne.s32.totalorder %s200, %s201
      %p213 = scmp.eq.s32.totalorder %s23, 1
      %p214 = por %p212, %p213
      %p216 = scmp.ne.s32.totalorder %s201, %s215
      %p217 = scmp.eq.s32.totalorder %s23, 0
      %p218 = por %p216, %p217
      %s220 = sadd.s32 %s219, 1
      %p223 = scmp.eq.s32.totalorder %s17, 1
      %p224 = scmp.ne.s32.totalorder %s219, %s221
      %p225 = scmp.eq.s32.totalorder %s17, 0
      %p226 = por %p224, %p225
      %p227 = scmp.ne.s32.totalorder %s219, %s221
      %p228 = scmp.eq.s32.totalorder %s22, 1
      %p229 = por %p227, %p228
      %p230 = scmp.ne.s32.totalorder %s221, %s222
      %p231 = scmp.eq.s32.totalorder %s22, 0
      %p232 = por %p230, %p231
      %p233 = scmp.ne.s32.totalorder %s221, %s222
      %p234 = scmp.eq.s32.totalorder %s23, 1
      %p235 = por %p233, %p234
      %p237 = scmp.ne.s32.totalorder %s222, %s236
      %p238 = scmp.eq.s32.totalorder %s23, 0
      %p239 = por %p237, %p238
      %s241 = sadd.s32 %s240, 1
      %p244 = scmp.eq.s32.totalorder %s17, 1
      %p245 = scmp.ne.s32.totalorder %s240, %s242
      %p246 = scmp.eq.s32.totalorder %s17, 0
      %p247 = por %p245, %p246
      %p248 = scmp.ne.s32.totalorder %s240, %s242
      %p249 = scmp.eq.s32.totalorder %s22, 1
      %p250 = por %p248, %p249
      %p251 = scmp.ne.s32.totalorder %s242, %s243
      %p252 = scmp.eq.s32.totalorder %s22, 0
      %p253 = por %p251, %p252
      %p254 = scmp.ne.s32.totalorder %s242, %s243
      %p255 = scmp.eq.s32.totalorder %s23, 1
      %p256 = por %p254, %p255
      %p258 = scmp.ne.s32.totalorder %s243, %s257
      %p259 = scmp.eq.s32.totalorder %s23, 0
      %p260 = por %p258, %p259
      %s261 = ssub.s32 %s17, %s24
      %p262 = scmp.eq.s32.totalorder %s261, 0
      %s264 = sadd.s32 %s263, 1
      %s265 = scalar_select %p262, %s263, %s264
      %p268 = pneg %p262
      %p269 = scmp.eq.s32.totalorder %s17, 1
      %p270 = por %p268, %p269
      %p271 = scmp.ne.s32.totalorder %s263, %s266
      %p272 = scmp.eq.s32.totalorder %s17, 0
      %p273 = por %p271, %p272
      %p274 = scmp.ne.s32.totalorder %s263, %s266
      %p275 = scmp.eq.s32.totalorder %s22, 1
      %p276 = por %p274, %p275
      %p277 = scmp.ne.s32.totalorder %s266, %s267
      %p278 = scmp.eq.s32.totalorder %s22, 0
      %p279 = por %p277, %p278
      %p280 = scmp.ne.s32.totalorder %s266, %s267
      %p281 = scmp.eq.s32.totalorder %s23, 1
      %p282 = por %p280, %p281
      %p284 = scmp.ne.s32.totalorder %s267, %s283
      %p285 = scmp.eq.s32.totalorder %s23, 0
      %p286 = por %p284, %p285
      %p287 = scmp.le.s32.totalorder 1, %s17
      %p288 = scmp.lt.s32.totalorder %s17, 3
      %p289 = pnand %p287, %p288
      %p290 = pneg %p289
      // Predicated region
      $region9: #{tpu_custom_call.1} parent=5 // pred_check
        _
      $region10: #{tpu_custom_call.1} parent=5 // pred_check_branch
        %292 = sbr.rel (%p289) target = $region12
      $region11: #{tpu_custom_call.1} parent=5 // pred_region
        %s293 = ssub.s32 %s17, 1
        // Predicated region
        $region13: #{tpu_custom_call.1} parent=11 // pred_check
          %p294 = pneg %p64
        $region14: #{tpu_custom_call.1} parent=11 // pred_check_branch
          %296 = sbr.rel (%p294) target = $region16
        $region15: #{tpu_custom_call.1} parent=11 // pred_region
          _
        $region16: #{tpu_custom_call.1} parent=11 // pred_fallthru
          _
        // Predicated region
        $region17: #{tpu_custom_call.1} parent=11 // pred_check
          %p297 = pneg %p85
        $region18: #{tpu_custom_call.1} parent=11 // pred_check_branch
          %299 = sbr.rel (%p297) target = $region20
        $region19: #{tpu_custom_call.1} parent=11 // pred_region
          _
        $region20: #{tpu_custom_call.1} parent=11 // pred_fallthru
          _
        // Predicated region
        $region21: #{tpu_custom_call.1} parent=11 // pred_check
          %p300 = pneg %p106
        $region22: #{tpu_custom_call.1} parent=11 // pred_check_branch
          %302 = sbr.rel (%p300) target = $region24
        $region23: #{tpu_custom_call.1} parent=11 // pred_region
          _
        $region24: #{tpu_custom_call.1} parent=11 // pred_fallthru
          _
        // Predicated region
        $region25: #{tpu_custom_call.1} parent=11 // pred_check
          %p303 = pneg %p127
        $region26: #{tpu_custom_call.1} parent=11 // pred_check_branch
          %305 = sbr.rel (%p303) target = $region28
        $region27: #{tpu_custom_call.1} parent=11 // pred_region
          _
        $region28: #{tpu_custom_call.1} parent=11 // pred_fallthru
          _
        // Predicated region
        $region29: #{tpu_custom_call.1} parent=11 // pred_check
          %p306 = pneg %p148
        $region30: #{tpu_custom_call.1} parent=11 // pred_check_branch
          %308 = sbr.rel (%p306) target = $region32
        $region31: #{tpu_custom_call.1} parent=11 // pred_region
          _
        $region32: #{tpu_custom_call.1} parent=11 // pred_fallthru
          _
        // Predicated region
        $region33: #{tpu_custom_call.1} parent=11 // pred_check
          %p309 = pneg %p169
        $region34: #{tpu_custom_call.1} parent=11 // pred_check_branch
          %311 = sbr.rel (%p309) target = $region36
        $region35: #{tpu_custom_call.1} parent=11 // pred_region
          _
        $region36: #{tpu_custom_call.1} parent=11 // pred_fallthru
          _
        // Predicated region
        $region37: #{tpu_custom_call.1} parent=11 // pred_check
          %p312 = pneg %p190
        $region38: #{tpu_custom_call.1} parent=11 // pred_check_branch
          %314 = sbr.rel (%p312) target = $region40
        $region39: #{tpu_custom_call.1} parent=11 // pred_region
          _
        $region40: #{tpu_custom_call.1} parent=11 // pred_fallthru
          _
        // Predicated region
        $region41: #{tpu_custom_call.1} parent=11 // pred_check
          %p315 = pneg %p211
        $region42: #{tpu_custom_call.1} parent=11 // pred_check_branch
          %317 = sbr.rel (%p315) target = $region44
        $region43: #{tpu_custom_call.1} parent=11 // pred_region
          _
        $region44: #{tpu_custom_call.1} parent=11 // pred_fallthru
          _
        // Predicated region
        $region45: #{tpu_custom_call.1} parent=11 // pred_check
          %p318 = pneg %p232
        $region46: #{tpu_custom_call.1} parent=11 // pred_check_branch
          %320 = sbr.rel (%p318) target = $region48
        $region47: #{tpu_custom_call.1} parent=11 // pred_region
          _
        $region48: #{tpu_custom_call.1} parent=11 // pred_fallthru
          _
        // Predicated region
        $region49: #{tpu_custom_call.1} parent=11 // pred_check
          %p321 = pneg %p253
        $region50: #{tpu_custom_call.1} parent=11 // pred_check_branch
          %323 = sbr.rel (%p321) target = $region52
        $region51: #{tpu_custom_call.1} parent=11 // pred_region
          _
        $region52: #{tpu_custom_call.1} parent=11 // pred_fallthru
          _
      $region12: #{tpu_custom_call.1} parent=5 // pred_fallthru
        _
      %p324 = scmp.lt.s32.totalorder %s17, 2
      // Predicated region
      $region53: #{tpu_custom_call.1} parent=5 // pred_check
        %p325 = pneg %p324
      $region54: #{tpu_custom_call.1} parent=5 // pred_check_branch
        %327 = sbr.rel (%p325) target = $region56
      $region55: #{tpu_custom_call.1} parent=5 // pred_region
        // Predicated region
        $region57: #{tpu_custom_call.1} parent=55 // pred_check
          %p328 = pneg %p37
        $region58: #{tpu_custom_call.1} parent=55 // pred_check_branch
          %330 = sbr.rel (%p328) target = $region60
        $region59: #{tpu_custom_call.1} parent=55 // pred_region
          %s331 = smul.u32 13, %s17
          %s332 = ssub.s32 25, %s331
          %p333 = scmp.lt.s32.totalorder %s332, 13
          %s334 = scalar_select %p333, %s332, 13
          %s335 = smul.u32 128, %s334
          %p336 = scmp.lt.s32.totalorder %s331, 24
          %s337 = scalar_select %p336, %s331, 24
          %s338 = smul.addr %s337, 8
          %s339 = scalar_lea.vmem %s0, %s338
          %s340 = smul.u32 13, %s17
          %s341 = ssub.s32 25, %s340
          %p342 = scmp.lt.s32.totalorder %s341, 13
          %s343 = scalar_select %p342, %s341, 13
          %s344 = smul.u32 128, %s343
        $region60: #{tpu_custom_call.1} parent=55 // pred_fallthru
          _
      $region56: #{tpu_custom_call.1} parent=5 // pred_fallthru
        _
      %p345 = scmp.le.s32.totalorder 1, %s17
      %p346 = scmp.lt.s32.totalorder %s17, 3
      %p347 = pnand %p345, %p346
      %p348 = pneg %p347
      // Predicated region
      $region61: #{tpu_custom_call.1} parent=5 // pred_check
        _
      $region62: #{tpu_custom_call.1} parent=5 // pred_check_branch
        %350 = sbr.rel (%p347) target = $region64
      $region63: #{tpu_custom_call.1} parent=5 // pred_region
        %s351 = ssub.s32 %s17, 1
        %s352 = smul.u32 13, %s22
        %s353 = ssub.s32 25, %s352
        %p354 = scmp.lt.s32.totalorder %s353, 13
        %s355 = scalar_select %p354, %s353, 13
        %s356 = smul.u32 128, %s355
        %p357 = scmp.lt.s32.totalorder %s352, 24
        %s358 = scalar_select %p357, %s352, 24
        %s359 = smul.addr %s358, 8
        %s360 = scalar_lea.vmem %s0, %s359
        %p361 = pneg %p43
        %p362 = pneg %p40
        %p363 = pneg %p64
        %p364 = pneg %p61
        %p365 = pneg %p85
        %p366 = pneg %p82
        %p367 = pneg %p106
        %p368 = pneg %p103
        %p369 = pneg %p127
        %p370 = pneg %p124
        %p371 = pneg %p148
        %p372 = pneg %p145
        %p373 = pneg %p169
        %p374 = pneg %p166
        %p375 = pneg %p190
        %p376 = pneg %p187
        %p377 = pneg %p211
        %p378 = pneg %p208
        %p379 = pneg %p232
        %p380 = pneg %p229
        %p381 = pneg %p253
        %p382 = pneg %p250
        %p383 = pneg %p279
        %p384 = pneg %p276
        %s385 = sand.u32 %s266, 1
        %s386 = sand.u32 %s266, 1
        %s387 = smul.addr %s386, 104
        %s388 = scalar_lea.vmem [#allocation2], %s387
        %s389 = smul.u32 13, %s22
        %s390 = ssub.s32 25, %s389
        %p391 = scmp.lt.s32.totalorder %s390, 13
        %s392 = scalar_select %p391, %s390, 13
        %s393 = smul.u32 128, %s392
        %p394 = scmp.lt.s32.totalorder %s389, 24
        %s395 = scalar_select %p394, %s389, 24
        %s396 = smul.addr %s395, 8
        %s397 = scalar_lea.vmem %s0, %s396
        %s398 = smul.u32 13, %s22
        %s399 = ssub.s32 25, %s398
        %p400 = scmp.lt.s32.totalorder %s399, 13
        %s401 = scalar_select %p400, %s399, 13
        %s402 = smul.u32 128, %s401
        %s403 = smul.u32 13, %s22
        %s404 = ssub.s32 25, %s403
        %p405 = scmp.lt.s32.totalorder %s404, 13
        %s406 = scalar_select %p405, %s404, 13
        %s407 = smul.u32 128, %s406
        %v408 = vld [vmem:[%s397] sm:$0xff]
        %v409 = vld [vmem:[%s397 + $0x8] sm:$0xff]
        %v410 = vld [vmem:[%s397 + $0x10] sm:$0xff]
        %v411 = vld [vmem:[%s397 + $0x18] sm:$0xff]
        %v412 = vld [vmem:[%s397 + $0x20] sm:$0xff]
        %v413 = vld [vmem:[%s397 + $0x28] sm:$0xff]
        %v414 = vld [vmem:[%s397 + $0x30] sm:$0xff]
        %v415 = vld [vmem:[%s397 + $0x38] sm:$0xff]
        %v416 = vld [vmem:[%s397 + $0x40] sm:$0xff]
        %v417 = vld [vmem:[%s397 + $0x48] sm:$0xff]
        %v418 = vld [vmem:[%s397 + $0x50] sm:$0xff]
        %v419 = vld [vmem:[%s397 + $0x58] sm:$0xff]
        %v420 = vld [vmem:[%s397 + $0x60] sm:$0xff]
        %v421 = vld [vmem:[%s1] sm:$0xff]
        %v422 = vld [vmem:[%s1 + $0x8] sm:$0xff]
        %v423 = vld [vmem:[%s1 + $0x10] sm:$0xff]
        %v424 = vld [vmem:[%s1 + $0x18] sm:$0xff]
        %v425 = vld [vmem:[%s2] sm:$0x1]
        %v427 = vlaneseq
        %v428 = vshrl.u32 %v427, 7
        %v429 = vsub.s32 0, %v428
        %v430 = vrot.slane %v425, %v429
        %vm432 = vcmask 261120
        %v434 = vsel %vm432, %v408, 0
        %v437 = vsel %vm432, %v409, 0
        %v440 = vsel %vm432, %v410, 0
        %v443 = vsel %vm432, %v411, 0
        %v446 = vsel %vm432, %v412, 0
        %v449 = vsel %vm432, %v413, 0
        %v452 = vsel %vm432, %v414, 0
        %v455 = vsel %vm432, %v415, 0
        %v458 = vsel %vm432, %v416, 0
        %v461 = vsel %vm432, %v417, 0
        %v464 = vsel %vm432, %v418, 0
        %v467 = vsel %vm432, %v419, 0
        %v470 = vsel %vm432, %v420, 0
        %472 = vmatprep.subr.mxu0 0.0
        %473 = vmatpush1.msra.mxu0 %v421
        %474 = vmatprep.subr.mxu0 0.0
        %475 = vmatpush1.msra.mxu0 %v422
        %476 = vmatprep.subr.mxu0 0.0
        %477 = vmatpush1.msra.mxu0 %v423
        %478 = vmatprep.subr.mxu0 0.0
        %479 = vmatpush1.msra.mxu0 %v424
        %480 = vmatprep.subr.mxu0 0.0
        %481 = vmatpush1.msra.mxu0 0.0
        %482 = vmatprep.subr.mxu0 0.0
        %483 = vmatpush1.msra.mxu0 0.0
        %484 = vmatprep.subr.mxu0 0.0
        %485 = vmatpush1.msra.mxu0 0.0
        %486 = vmatprep.subr.mxu0 0.0
        %487 = vmatpush1.msra.mxu0 0.0
        %488 = vmatprep.subr.mxu0 0.0
        %489 = vmatpush1.msra.mxu0 0.0
        %490 = vmatprep.subr.mxu0 0.0
        %491 = vmatpush1.msra.mxu0 0.0
        %492 = vmatprep.subr.mxu0 0.0
        %493 = vmatpush1.msra.mxu0 0.0
        %494 = vmatprep.subr.mxu0 0.0
        %495 = vmatpush1.msra.mxu0 0.0
        %496 = vmatprep.subr.mxu0 0.0
        %497 = vmatpush1.msra.mxu0 0.0
        %498 = vmatprep.subr.mxu0 0.0
        %499 = vmatpush1.msra.mxu0 0.0
        %500 = vmatprep.subr.mxu0 0.0
        %501 = vmatpush1.msra.mxu0 0.0
        %502 = vmatprep.subr.mxu0 0.0
        %503 = vmatpush1.msra.mxu0 0.0
        %504 = vmatprep.subr.mxu0 0.0
        %505 = vmatpush1.msra.mxu0 0.0
        %506 = vmatprep.subr.mxu0 0.0
        %507 = vmatpush1.msra.mxu0 0.0
        %508 = vmatprep.subr.mxu0 0.0
        %509 = vmatpush1.msra.mxu0 0.0
        %510 = vmatprep.subr.mxu0 0.0
        %511 = vmatpush1.msra.mxu0 0.0
        %512 = vmatprep.subr.mxu0 0.0
        %513 = vmatpush1.msra.mxu0 0.0
        %514 = vmatprep.subr.mxu0 0.0
        %515 = vmatpush1.msra.mxu0 0.0
        %516 = vmatprep.subr.mxu0 0.0
        %517 = vmatpush1.msra.mxu0 0.0
        %518 = vmatprep.subr.mxu0 0.0
        %519 = vmatpush1.msra.mxu0 0.0
        %520 = vmatprep.subr.mxu0 0.0
        %521 = vmatpush1.msra.mxu0 0.0
        %522 = vmatprep.subr.mxu0 0.0
        %523 = vmatpush1.msra.mxu0 0.0
        %524 = vmatprep.subr.mxu0 0.0
        %525 = vmatpush1.msra.mxu0 0.0
        %526 = vmatprep.subr.mxu0 0.0
        %527 = vmatpush1.msra.mxu0 0.0
        %528 = vmatprep.subr.mxu0 0.0
        %529 = vmatpush1.msra.mxu0 0.0
        %530 = vmatprep.subr.mxu0 0.0
        %531 = vmatpush1.msra.mxu0 0.0
        %532 = vmatprep.subr.mxu0 0.0
        %533 = vmatpush1.msra.mxu0 0.0
        %534 = vmatprep.subr.mxu0 0.0
        %535 = vmatpush1.msra.mxu0 0.0
        %536 = vmatprep.mubr.f32.mxu0 0.0
        %537 = vmatmul.mubr.f32.gmra.mrb[0].mxu0 %v434
        %v538 = vpop.f32.mrb[0].mxu0
        %v539 = vadd.f32 %v430, %v538
        %v540 = vpop.f32.mrb[0].mxu0
        %541 = vmatprep.mubr.f32.mxu0 0.0
        %542 = vmatmul.mubr.f32.gmra.mrb[0].mxu0 %v437
        %v543 = vpop.f32.mrb[0].mxu0
        %v544 = vadd.f32 %v430, %v543
        %v545 = vpop.f32.mrb[0].mxu0
        %546 = vmatprep.mubr.f32.mxu0 0.0
        %547 = vmatmul.mubr.f32.gmra.mrb[0].mxu0 %v440
        %v548 = vpop.f32.mrb[0].mxu0
        %v549 = vadd.f32 %v430, %v548
        %v550 = vpop.f32.mrb[0].mxu0
        %551 = vmatprep.mubr.f32.mxu0 0.0
        %552 = vmatmul.mubr.f32.gmra.mrb[0].mxu0 %v443
        %v553 = vpop.f32.mrb[0].mxu0
        %v554 = vadd.f32 %v430, %v553
        %v555 = vpop.f32.mrb[0].mxu0
        %556 = vmatprep.mubr.f32.mxu0 0.0
        %557 = vmatmul.mubr.f32.gmra.mrb[0].mxu0 %v446
        %v558 = vpop.f32.mrb[0].mxu0
        %v559 = vadd.f32 %v430, %v558
        %v560 = vpop.f32.mrb[0].mxu0
        %561 = vmatprep.mubr.f32.mxu0 0.0
        %562 = vmatmul.mubr.f32.gmra.mrb[0].mxu0 %v449
        %v563 = vpop.f32.mrb[0].mxu0
        %v564 = vadd.f32 %v430, %v563
        %v565 = vpop.f32.mrb[0].mxu0
        %566 = vmatprep.mubr.f32.mxu0 0.0
        %567 = vmatmul.mubr.f32.gmra.mrb[0].mxu0 %v452
        %v568 = vpop.f32.mrb[0].mxu0
        %v569 = vadd.f32 %v430, %v568
        %v570 = vpop.f32.mrb[0].mxu0
        %571 = vmatprep.mubr.f32.mxu0 0.0
        %572 = vmatmul.mubr.f32.gmra.mrb[0].mxu0 %v455
        %v573 = vpop.f32.mrb[0].mxu0
        %v574 = vadd.f32 %v430, %v573
        %v575 = vpop.f32.mrb[0].mxu0
        %576 = vmatprep.mubr.f32.mxu0 0.0
        %577 = vmatmul.mubr.f32.gmra.mrb[0].mxu0 %v458
        %v578 = vpop.f32.mrb[0].mxu0
        %v579 = vadd.f32 %v430, %v578
        %v580 = vpop.f32.mrb[0].mxu0
        %581 = vmatprep.mubr.f32.mxu0 0.0
        %582 = vmatmul.mubr.f32.gmra.mrb[0].mxu0 %v461
        %v583 = vpop.f32.mrb[0].mxu0
        %v584 = vadd.f32 %v430, %v583
        %v585 = vpop.f32.mrb[0].mxu0
        %586 = vmatprep.mubr.f32.mxu0 0.0
        %587 = vmatmul.mubr.f32.gmra.mrb[0].mxu0 %v464
        %v588 = vpop.f32.mrb[0].mxu0
        %v589 = vadd.f32 %v430, %v588
        %v590 = vpop.f32.mrb[0].mxu0
        %591 = vmatprep.mubr.f32.mxu0 0.0
        %592 = vmatmul.mubr.f32.gmra.mrb[0].mxu0 %v467
        %v593 = vpop.f32.mrb[0].mxu0
        %v594 = vadd.f32 %v430, %v593
        %v595 = vpop.f32.mrb[0].mxu0
        %596 = vmatprep.mubr.f32.mxu0 0.0
        %597 = vmatmul.mubr.f32.gmra.mrb[0].mxu0 %v470
        %v598 = vpop.f32.mrb[0].mxu0
        %v599 = vadd.f32 %v430, %v598
        %v600 = vpop.f32.mrb[0].mxu0
        %601 = vdwg.mxu0
        %v602 = vld [vmem:[%s3] sm:$0x1]
        %v603 = vld [vmem:[%s4] sm:$0x1]
        %vm604 = vcmask 523264
        %v605 = vsel %vm604, %v539, 0.0
        %606 = vadd.xlane.f32.xlu0 %v605
        %v607 = vpop.xlane.xlu0 %606
        %v608 = vsel %vm604, %v544, 0.0
        %609 = vadd.xlane.f32.xlu0 %v608
        %v610 = vpop.xlane.xlu0 %609
        %v611 = vsel %vm604, %v549, 0.0
        %612 = vadd.xlane.f32.xlu0 %v611
        %v613 = vpop.xlane.xlu0 %612
        %v614 = vsel %vm604, %v554, 0.0
        %615 = vadd.xlane.f32.xlu0 %v614
        %v616 = vpop.xlane.xlu0 %615
        %v617 = vsel %vm604, %v559, 0.0
        %618 = vadd.xlane.f32.xlu0 %v617
        %v619 = vpop.xlane.xlu0 %618
        %v620 = vsel %vm604, %v564, 0.0
        %621 = vadd.xlane.f32.xlu0 %v620
        %v622 = vpop.xlane.xlu0 %621
        %v623 = vsel %vm604, %v569, 0.0
        %624 = vadd.xlane.f32.xlu0 %v623
        %v625 = vpop.xlane.xlu0 %624
        %v626 = vsel %vm604, %v574, 0.0
        %627 = vadd.xlane.f32.xlu0 %v626
        %v628 = vpop.xlane.xlu0 %627
        %v629 = vsel %vm604, %v579, 0.0
        %630 = vadd.xlane.f32.xlu0 %v629
        %v631 = vpop.xlane.xlu0 %630
        %v632 = vsel %vm604, %v584, 0.0
        %633 = vadd.xlane.f32.xlu0 %v632
        %v634 = vpop.xlane.xlu0 %633
        %v635 = vsel %vm604, %v589, 0.0
        %636 = vadd.xlane.f32.xlu0 %v635
        %v637 = vpop.xlane.xlu0 %636
        %v638 = vsel %vm604, %v594, 0.0
        %639 = vadd.xlane.f32.xlu0 %v638
        %v640 = vpop.xlane.xlu0 %639
        %v641 = vsel %vm604, %v599, 0.0
        %642 = vadd.xlane.f32.xlu0 %v641
        %v643 = vpop.xlane.xlu0 %642
        %v644 = vrcp.pop 64.0
        %v645 = vmul.f32 %v607, %v644
        %v646 = vmul.f32 %v610, %v644
        %v647 = vmul.f32 %v613, %v644
        %v648 = vmul.f32 %v616, %v644
        %v649 = vmul.f32 %v619, %v644
        %v650 = vmul.f32 %v622, %v644
        %v651 = vmul.f32 %v625, %v644
        %v652 = vmul.f32 %v628, %v644
        %v653 = vmul.f32 %v631, %v644
        %v654 = vmul.f32 %v634, %v644
        %v655 = vmul.f32 %v637, %v644
        %v656 = vmul.f32 %v640, %v644
        %v657 = vmul.f32 %v643, %v644
        %v658 = vsub.f32 %v539, %v645
        %v659 = vsub.f32 %v544, %v646
        %v660 = vsub.f32 %v549, %v647
        %v661 = vsub.f32 %v554, %v648
        %v662 = vsub.f32 %v559, %v649
        %v663 = vsub.f32 %v564, %v650
        %v664 = vsub.f32 %v569, %v651
        %v665 = vsub.f32 %v574, %v652
        %v666 = vsub.f32 %v579, %v653
        %v667 = vsub.f32 %v584, %v654
        %v668 = vsub.f32 %v589, %v655
        %v669 = vsub.f32 %v594, %v656
        %v670 = vsub.f32 %v599, %v657
        %v671 = vmul.f32 %v658, %v658
        %v672 = vmul.f32 %v659, %v659
        %v673 = vmul.f32 %v660, %v660
        %v674 = vmul.f32 %v661, %v661
        %v675 = vmul.f32 %v662, %v662
        %v676 = vmul.f32 %v663, %v663
        %v677 = vmul.f32 %v664, %v664
        %v678 = vmul.f32 %v665, %v665
        %v679 = vmul.f32 %v666, %v666
        %v680 = vmul.f32 %v667, %v667
        %v681 = vmul.f32 %v668, %v668
        %v682 = vmul.f32 %v669, %v669
        %v683 = vmul.f32 %v670, %v670
        %v684 = vsel %vm604, %v671, 0.0
        %685 = vadd.xlane.f32.xlu0 %v684
        %v686 = vpop.xlane.xlu0 %685
        %v687 = vsel %vm604, %v672, 0.0
        %688 = vadd.xlane.f32.xlu0 %v687
        %v689 = vpop.xlane.xlu0 %688
        %v690 = vsel %vm604, %v673, 0.0
        %691 = vadd.xlane.f32.xlu0 %v690
        %v692 = vpop.xlane.xlu0 %691
        %v693 = vsel %vm604, %v674, 0.0
        %694 = vadd.xlane.f32.xlu0 %v693
        %v695 = vpop.xlane.xlu0 %694
        %v696 = vsel %vm604, %v675, 0.0
        %697 = vadd.xlane.f32.xlu0 %v696
        %v698 = vpop.xlane.xlu0 %697
        %v699 = vsel %vm604, %v676, 0.0
        %700 = vadd.xlane.f32.xlu0 %v699
        %v701 = vpop.xlane.xlu0 %700
        %v702 = vsel %vm604, %v677, 0.0
        %703 = vadd.xlane.f32.xlu0 %v702
        %v704 = vpop.xlane.xlu0 %703
        %v705 = vsel %vm604, %v678, 0.0
        %706 = vadd.xlane.f32.xlu0 %v705
        %v707 = vpop.xlane.xlu0 %706
        %v708 = vsel %vm604, %v679, 0.0
        %709 = vadd.xlane.f32.xlu0 %v708
        %v710 = vpop.xlane.xlu0 %709
        %v711 = vsel %vm604, %v680, 0.0
        %712 = vadd.xlane.f32.xlu0 %v711
        %v713 = vpop.xlane.xlu0 %712
        %v714 = vsel %vm604, %v681, 0.0
        %715 = vadd.xlane.f32.xlu0 %v714
        %v716 = vpop.xlane.xlu0 %715
        %v717 = vsel %vm604, %v682, 0.0
        %718 = vadd.xlane.f32.xlu0 %v717
        %v719 = vpop.xlane.xlu0 %718
        %v720 = vsel %vm604, %v683, 0.0
        %721 = vadd.xlane.f32.xlu0 %v720
        %v722 = vpop.xlane.xlu0 %721
        %v723 = vmul.f32 %v686, %v644
        %v724 = vmul.f32 %v689, %v644
        %v725 = vmul.f32 %v692, %v644
        %v726 = vmul.f32 %v695, %v644
        %v727 = vmul.f32 %v698, %v644
        %v728 = vmul.f32 %v701, %v644
        %v729 = vmul.f32 %v704, %v644
        %v730 = vmul.f32 %v707, %v644
        %v731 = vmul.f32 %v710, %v644
        %v732 = vmul.f32 %v713, %v644
        %v733 = vmul.f32 %v716, %v644
        %v734 = vmul.f32 %v719, %v644
        %v735 = vmul.f32 %v722, %v644
        %v736 = vadd.f32 %v723, 1e-05
        %v737 = vadd.f32 %v724, 1e-05
        %v738 = vadd.f32 %v725, 1e-05
        %v739 = vadd.f32 %v726, 1e-05
        %v740 = vadd.f32 %v727, 1e-05
        %v741 = vadd.f32 %v728, 1e-05
        %v742 = vadd.f32 %v729, 1e-05
        %v743 = vadd.f32 %v730, 1e-05
        %v744 = vadd.f32 %v731, 1e-05
        %v745 = vadd.f32 %v732, 1e-05
        %v746 = vadd.f32 %v733, 1e-05
        %v747 = vadd.f32 %v734, 1e-05
        %v748 = vadd.f32 %v735, 1e-05
        %v749 = vrsqrt.pop %v736
        %v750 = vrsqrt.pop %v737
        %v751 = vrsqrt.pop %v738
        %v752 = vrsqrt.pop %v739
        %v753 = vrsqrt.pop %v740
        %v754 = vrsqrt.pop %v741
        %v755 = vrsqrt.pop %v742
        %v756 = vrsqrt.pop %v743
        %v757 = vrsqrt.pop %v744
        %v758 = vrsqrt.pop %v745
        %v759 = vrsqrt.pop %v746
        %v760 = vrsqrt.pop %v747
        %v761 = vrsqrt.pop %v748
        %v762 = vmul.f32 %v658, %v749
        %v763 = vmul.f32 %v659, %v750
        %v764 = vmul.f32 %v660, %v751
        %v765 = vmul.f32 %v661, %v752
        %v766 = vmul.f32 %v662, %v753
        %v767 = vmul.f32 %v663, %v754
        %v768 = vmul.f32 %v664, %v755
        %v769 = vmul.f32 %v665, %v756
        %v770 = vmul.f32 %v666, %v757
        %v771 = vmul.f32 %v667, %v758
        %v772 = vmul.f32 %v668, %v759
        %v773 = vmul.f32 %v669, %v760
        %v774 = vmul.f32 %v670, %v761
        %v776 = vlaneseq
        %v777 = vshrl.u32 %v776, 7
        %v778 = vsub.s32 0, %v777
        %v779 = vrot.slane %v602, %v778
        %v781 = vmul.f32 %v762, %v779
        %v782 = vmul.f32 %v763, %v779
        %v783 = vmul.f32 %v764, %v779
        %v784 = vmul.f32 %v765, %v779
        %v785 = vmul.f32 %v766, %v779
        %v786 = vmul.f32 %v767, %v779
        %v787 = vmul.f32 %v768, %v779
        %v788 = vmul.f32 %v769, %v779
        %v789 = vmul.f32 %v770, %v779
        %v790 = vmul.f32 %v771, %v779
        %v791 = vmul.f32 %v772, %v779
        %v792 = vmul.f32 %v773, %v779
        %v793 = vmul.f32 %v774, %v779
        %v795 = vlaneseq
        %v796 = vshrl.u32 %v795, 7
        %v797 = vsub.s32 0, %v796
        %v798 = vrot.slane %v603, %v797
        %v800 = vadd.f32 %v781, %v798
        %v801 = vadd.f32 %v782, %v798
        %v802 = vadd.f32 %v783, %v798
        %v803 = vadd.f32 %v784, %v798
        %v804 = vadd.f32 %v785, %v798
        %v805 = vadd.f32 %v786, %v798
        %v806 = vadd.f32 %v787, %v798
        %v807 = vadd.f32 %v788, %v798
        %v808 = vadd.f32 %v789, %v798
        %v809 = vadd.f32 %v790, %v798
        %v810 = vadd.f32 %v791, %v798
        %v811 = vadd.f32 %v792, %v798
        %v812 = vadd.f32 %v793, %v798
        %v813 = vsub.f32 0.0, %v800
        %v814 = vsub.f32 0.0, %v801
        %v815 = vsub.f32 0.0, %v802
        %v816 = vsub.f32 0.0, %v803
        %v817 = vsub.f32 0.0, %v804
        %v818 = vsub.f32 0.0, %v805
        %v819 = vsub.f32 0.0, %v806
        %v820 = vsub.f32 0.0, %v807
        %v821 = vsub.f32 0.0, %v808
        %v822 = vsub.f32 0.0, %v809
        %v823 = vsub.f32 0.0, %v810
        %v824 = vsub.f32 0.0, %v811
        %v825 = vsub.f32 0.0, %v812
        %v826 = vmul.f32 %v813, 1.442695
        %v827 = vpow.pop %v826
        %v828 = vmul.f32 %v814, 1.442695
        %v829 = vpow.pop %v828
        %v830 = vmul.f32 %v815, 1.442695
        %v831 = vpow.pop %v830
        %v832 = vmul.f32 %v816, 1.442695
        %v833 = vpow.pop %v832
        %v834 = vmul.f32 %v817, 1.442695
        %v835 = vpow.pop %v834
        %v836 = vmul.f32 %v818, 1.442695
        %v837 = vpow.pop %v836
        %v838 = vmul.f32 %v819, 1.442695
        %v839 = vpow.pop %v838
        %v840 = vmul.f32 %v820, 1.442695
        %v841 = vpow.pop %v840
        %v842 = vmul.f32 %v821, 1.442695
        %v843 = vpow.pop %v842
        %v844 = vmul.f32 %v822, 1.442695
        %v845 = vpow.pop %v844
        %v846 = vmul.f32 %v823, 1.442695
        %v847 = vpow.pop %v846
        %v848 = vmul.f32 %v824, 1.442695
        %v849 = vpow.pop %v848
        %v850 = vmul.f32 %v825, 1.442695
        %v851 = vpow.pop %v850
        %v852 = vadd.f32 %v827, 1.0
        %v853 = vadd.f32 %v829, 1.0
        %v854 = vadd.f32 %v831, 1.0
        %v855 = vadd.f32 %v833, 1.0
        %v856 = vadd.f32 %v835, 1.0
        %v857 = vadd.f32 %v837, 1.0
        %v858 = vadd.f32 %v839, 1.0
        %v859 = vadd.f32 %v841, 1.0
        %v860 = vadd.f32 %v843, 1.0
        %v861 = vadd.f32 %v845, 1.0
        %v862 = vadd.f32 %v847, 1.0
        %v863 = vadd.f32 %v849, 1.0
        %v864 = vadd.f32 %v851, 1.0
        %v865 = vrcp.pop %v852
        %v866 = vmul.f32 1.0, %v865
        %v867 = vrcp.pop %v853
        %v868 = vmul.f32 1.0, %v867
        %v869 = vrcp.pop %v854
        %v870 = vmul.f32 1.0, %v869
        %v871 = vrcp.pop %v855
        %v872 = vmul.f32 1.0, %v871
        %v873 = vrcp.pop %v856
        %v874 = vmul.f32 1.0, %v873
        %v875 = vrcp.pop %v857
        %v876 = vmul.f32 1.0, %v875
        %v877 = vrcp.pop %v858
        %v878 = vmul.f32 1.0, %v877
        %v879 = vrcp.pop %v859
        %v880 = vmul.f32 1.0, %v879
        %v881 = vrcp.pop %v860
        %v882 = vmul.f32 1.0, %v881
        %v883 = vrcp.pop %v861
        %v884 = vmul.f32 1.0, %v883
        %v885 = vrcp.pop %v862
        %v886 = vmul.f32 1.0, %v885
        %v887 = vrcp.pop %v863
        %v888 = vmul.f32 1.0, %v887
        %v889 = vrcp.pop %v864
        %v890 = vmul.f32 1.0, %v889
        %v891 = vmul.f32 %v800, %v866
        %v892 = vmul.f32 %v801, %v868
        %v893 = vmul.f32 %v802, %v870
        %v894 = vmul.f32 %v803, %v872
        %v895 = vmul.f32 %v804, %v874
        %v896 = vmul.f32 %v805, %v876
        %v897 = vmul.f32 %v806, %v878
        %v898 = vmul.f32 %v807, %v880
        %v899 = vmul.f32 %v808, %v882
        %v900 = vmul.f32 %v809, %v884
        %v901 = vmul.f32 %v810, %v886
        %v902 = vmul.f32 %v811, %v888
        %v903 = vmul.f32 %v812, %v890
        %v904 = vld [vmem:[%s5] sm:$0xff]
        %v905 = vld [vmem:[%s5 + $0x8] sm:$0xff]
        %v906 = vld [vmem:[%s5 + $0x10] sm:$0xff]
        %v907 = vld [vmem:[%s5 + $0x18] sm:$0xff]
        %v908 = vld [vmem:[%s5 + $0x20] sm:$0xff]
        %v909 = vld [vmem:[%s5 + $0x28] sm:$0xff]
        %v910 = vld [vmem:[%s5 + $0x30] sm:$0xff]
        %v911 = vld [vmem:[%s5 + $0x38] sm:$0xff]
        %v912 = vld [vmem:[%s6] sm:$0x1]
        %v914 = vlaneseq
        %v915 = vshrl.u32 %v914, 7
        %v916 = vsub.s32 0, %v915
        %v917 = vrot.slane %v912, %v916
        %v920 = vsel %vm604, %v891, 0
        %v923 = vsel %vm604, %v892, 0
        %v926 = vsel %vm604, %v893, 0
        %v929 = vsel %vm604, %v894, 0
        %v932 = vsel %vm604, %v895, 0
        %v935 = vsel %vm604, %v896, 0
        %v938 = vsel %vm604, %v897, 0
        %v941 = vsel %vm604, %v898, 0
        %v944 = vsel %vm604, %v899, 0
        %v947 = vsel %vm604, %v900, 0
        %v950 = vsel %vm604, %v901, 0
        %v953 = vsel %vm604, %v902, 0
        %v956 = vsel %vm604, %v903, 0
        %958 = vmatprep.subr.mxu0 0.0
        %959 = vmatpush1.msra.mxu0 %v904
        %960 = vmatprep.subr.mxu0 0.0
        %961 = vmatpush1.msra.mxu0 %v905
        %962 = vmatprep.subr.mxu0 0.0
        %963 = vmatpush1.msra.mxu0 %v906
        %964 = vmatprep.subr.mxu0 0.0
        %965 = vmatpush1.msra.mxu0 %v907
        %966 = vmatprep.subr.mxu0 0.0
        %967 = vmatpush1.msra.mxu0 %v908
        %968 = vmatprep.subr.mxu0 0.0
        %969 = vmatpush1.msra.mxu0 %v909
        %970 = vmatprep.subr.mxu0 0.0
        %971 = vmatpush1.msra.mxu0 %v910
        %972 = vmatprep.subr.mxu0 0.0
        %973 = vmatpush1.msra.mxu0 %v911
        %974 = vmatprep.subr.mxu0 0.0
        %975 = vmatpush1.msra.mxu0 0.0
        %976 = vmatprep.subr.mxu0 0.0
        %977 = vmatpush1.msra.mxu0 0.0
        %978 = vmatprep.subr.mxu0 0.0
        %979 = vmatpush1.msra.mxu0 0.0
        %980 = vmatprep.subr.mxu0 0.0
        %981 = vmatpush1.msra.mxu0 0.0
        %982 = vmatprep.subr.mxu0 0.0
        %983 = vmatpush1.msra.mxu0 0.0
        %984 = vmatprep.subr.mxu0 0.0
        %985 = vmatpush1.msra.mxu0 0.0
        %986 = vmatprep.subr.mxu0 0.0
        %987 = vmatpush1.msra.mxu0 0.0
        %988 = vmatprep.subr.mxu0 0.0
        %989 = vmatpush1.msra.mxu0 0.0
        %990 = vmatprep.subr.mxu0 0.0
        %991 = vmatpush1.msra.mxu0 0.0
        %992 = vmatprep.subr.mxu0 0.0
        %993 = vmatpush1.msra.mxu0 0.0
        %994 = vmatprep.subr.mxu0 0.0
        %995 = vmatpush1.msra.mxu0 0.0
        %996 = vmatprep.subr.mxu0 0.0
        %997 = vmatpush1.msra.mxu0 0.0
        %998 = vmatprep.subr.mxu0 0.0
        %999 = vmatpush1.msra.mxu0 0.0
        %1000 = vmatprep.subr.mxu0 0.0
        %1001 = vmatpush1.msra.mxu0 0.0
        %1002 = vmatprep.subr.mxu0 0.0
        %1003 = vmatpush1.msra.mxu0 0.0
        %1004 = vmatprep.subr.mxu0 0.0
        %1005 = vmatpush1.msra.mxu0 0.0
        %1006 = vmatprep.subr.mxu0 0.0
        %1007 = vmatpush1.msra.mxu0 0.0
        %1008 = vmatprep.subr.mxu0 0.0
        %1009 = vmatpush1.msra.mxu0 0.0
        %1010 = vmatprep.subr.mxu0 0.0
        %1011 = vmatpush1.msra.mxu0 0.0
        %1012 = vmatprep.subr.mxu0 0.0
        %1013 = vmatpush1.msra.mxu0 0.0
        %1014 = vmatprep.subr.mxu0 0.0
        %1015 = vmatpush1.msra.mxu0 0.0
        %1016 = vmatprep.subr.mxu0 0.0
        %1017 = vmatpush1.msra.mxu0 0.0
        %1018 = vmatprep.subr.mxu0 0.0
        %1019 = vmatpush1.msra.mxu0 0.0
        %1020 = vmatprep.subr.mxu0 0.0
        %1021 = vmatpush1.msra.mxu0 0.0
        %1022 = vmatprep.mubr.f32.mxu0 0.0
        %1023 = vmatmul.mubr.f32.gmra.mrb[0].mxu0 %v920
        %v1024 = vpop.f32.mrb[0].mxu0
        %v1025 = vadd.f32 %v917, %v1024
        %v1026 = vpop.f32.mrb[0].mxu0
        %1027 = vmatprep.mubr.f32.mxu0 0.0
        %1028 = vmatmul.mubr.f32.gmra.mrb[0].mxu0 %v923
        %v1029 = vpop.f32.mrb[0].mxu0
        %v1030 = vadd.f32 %v917, %v1029
        %v1031 = vpop.f32.mrb[0].mxu0
        %1032 = vmatprep.mubr.f32.mxu0 0.0
        %1033 = vmatmul.mubr.f32.gmra.mrb[0].mxu0 %v926
        %v1034 = vpop.f32.mrb[0].mxu0
        %v1035 = vadd.f32 %v917, %v1034
        %v1036 = vpop.f32.mrb[0].mxu0
        %1037 = vmatprep.mubr.f32.mxu0 0.0
        %1038 = vmatmul.mubr.f32.gmra.mrb[0].mxu0 %v929
        %v1039 = vpop.f32.mrb[0].mxu0
        %v1040 = vadd.f32 %v917, %v1039
        %v1041 = vpop.f32.mrb[0].mxu0
        %1042 = vmatprep.mubr.f32.mxu0 0.0
        %1043 = vmatmul.mubr.f32.gmra.mrb[0].mxu0 %v932
        %v1044 = vpop.f32.mrb[0].mxu0
        %v1045 = vadd.f32 %v917, %v1044
        %v1046 = vpop.f32.mrb[0].mxu0
        %1047 = vmatprep.mubr.f32.mxu0 0.0
        %1048 = vmatmul.mubr.f32.gmra.mrb[0].mxu0 %v935
        %v1049 = vpop.f32.mrb[0].mxu0
        %v1050 = vadd.f32 %v917, %v1049
        %v1051 = vpop.f32.mrb[0].mxu0
        %1052 = vmatprep.mubr.f32.mxu0 0.0
        %1053 = vmatmul.mubr.f32.gmra.mrb[0].mxu0 %v938
        %v1054 = vpop.f32.mrb[0].mxu0
        %v1055 = vadd.f32 %v917, %v1054
        %v1056 = vpop.f32.mrb[0].mxu0
        %1057 = vmatprep.mubr.f32.mxu0 0.0
        %1058 = vmatmul.mubr.f32.gmra.mrb[0].mxu0 %v941
        %v1059 = vpop.f32.mrb[0].mxu0
        %v1060 = vadd.f32 %v917, %v1059
        %v1061 = vpop.f32.mrb[0].mxu0
        %1062 = vmatprep.mubr.f32.mxu0 0.0
        %1063 = vmatmul.mubr.f32.gmra.mrb[0].mxu0 %v944
        %v1064 = vpop.f32.mrb[0].mxu0
        %v1065 = vadd.f32 %v917, %v1064
        %v1066 = vpop.f32.mrb[0].mxu0
        %1067 = vmatprep.mubr.f32.mxu0 0.0
        %1068 = vmatmul.mubr.f32.gmra.mrb[0].mxu0 %v947
        %v1069 = vpop.f32.mrb[0].mxu0
        %v1070 = vadd.f32 %v917, %v1069
        %v1071 = vpop.f32.mrb[0].mxu0
        %1072 = vmatprep.mubr.f32.mxu0 0.0
        %1073 = vmatmul.mubr.f32.gmra.mrb[0].mxu0 %v950
        %v1074 = vpop.f32.mrb[0].mxu0
        %v1075 = vadd.f32 %v917, %v1074
        %v1076 = vpop.f32.mrb[0].mxu0
        %1077 = vmatprep.mubr.f32.mxu0 0.0
        %1078 = vmatmul.mubr.f32.gmra.mrb[0].mxu0 %v953
        %v1079 = vpop.f32.mrb[0].mxu0
        %v1080 = vadd.f32 %v917, %v1079
        %v1081 = vpop.f32.mrb[0].mxu0
        %1082 = vmatprep.mubr.f32.mxu0 0.0
        %1083 = vmatmul.mubr.f32.gmra.mrb[0].mxu0 %v956
        %v1084 = vpop.f32.mrb[0].mxu0
        %v1085 = vadd.f32 %v917, %v1084
        %v1086 = vpop.f32.mrb[0].mxu0
        %1087 = vdwg.mxu0
        %v1088 = vld [vmem:[%s7] sm:$0x1]
        %v1089 = vld [vmem:[%s8] sm:$0x1]
        %v1090 = vsel %vm604, %v1025, 0.0
        %1091 = vadd.xlane.f32.xlu0 %v1090
        %v1092 = vpop.xlane.xlu0 %1091
        %v1093 = vsel %vm604, %v1030, 0.0
        %1094 = vadd.xlane.f32.xlu0 %v1093
        %v1095 = vpop.xlane.xlu0 %1094
        %v1096 = vsel %vm604, %v1035, 0.0
        %1097 = vadd.xlane.f32.xlu0 %v1096
        %v1098 = vpop.xlane.xlu0 %1097
        %v1099 = vsel %vm604, %v1040, 0.0
        %1100 = vadd.xlane.f32.xlu0 %v1099
        %v1101 = vpop.xlane.xlu0 %1100
        %v1102 = vsel %vm604, %v1045, 0.0
        %1103 = vadd.xlane.f32.xlu0 %v1102
        %v1104 = vpop.xlane.xlu0 %1103
        %v1105 = vsel %vm604, %v1050, 0.0
        %1106 = vadd.xlane.f32.xlu0 %v1105
        %v1107 = vpop.xlane.xlu0 %1106
        %v1108 = vsel %vm604, %v1055, 0.0
        %1109 = vadd.xlane.f32.xlu0 %v1108
        %v1110 = vpop.xlane.xlu0 %1109
        %v1111 = vsel %vm604, %v1060, 0.0
        %1112 = vadd.xlane.f32.xlu0 %v1111
        %v1113 = vpop.xlane.xlu0 %1112
        %v1114 = vsel %vm604, %v1065, 0.0
        %1115 = vadd.xlane.f32.xlu0 %v1114
        %v1116 = vpop.xlane.xlu0 %1115
        %v1117 = vsel %vm604, %v1070, 0.0
        %1118 = vadd.xlane.f32.xlu0 %v1117
        %v1119 = vpop.xlane.xlu0 %1118
        %v1120 = vsel %vm604, %v1075, 0.0
        %1121 = vadd.xlane.f32.xlu0 %v1120
        %v1122 = vpop.xlane.xlu0 %1121
        %v1123 = vsel %vm604, %v1080, 0.0
        %1124 = vadd.xlane.f32.xlu0 %v1123
        %v1125 = vpop.xlane.xlu0 %1124
        %v1126 = vsel %vm604, %v1085, 0.0
        %1127 = vadd.xlane.f32.xlu0 %v1126
        %v1128 = vpop.xlane.xlu0 %1127
        %v1129 = vmul.f32 %v1092, %v644
        %v1130 = vmul.f32 %v1095, %v644
        %v1131 = vmul.f32 %v1098, %v644
        %v1132 = vmul.f32 %v1101, %v644
        %v1133 = vmul.f32 %v1104, %v644
        %v1134 = vmul.f32 %v1107, %v644
        %v1135 = vmul.f32 %v1110, %v644
        %v1136 = vmul.f32 %v1113, %v644
        %v1137 = vmul.f32 %v1116, %v644
        %v1138 = vmul.f32 %v1119, %v644
        %v1139 = vmul.f32 %v1122, %v644
        %v1140 = vmul.f32 %v1125, %v644
        %v1141 = vmul.f32 %v1128, %v644
        %v1142 = vsub.f32 %v1025, %v1129
        %v1143 = vsub.f32 %v1030, %v1130
        %v1144 = vsub.f32 %v1035, %v1131
        %v1145 = vsub.f32 %v1040, %v1132
        %v1146 = vsub.f32 %v1045, %v1133
        %v1147 = vsub.f32 %v1050, %v1134
        %v1148 = vsub.f32 %v1055, %v1135
        %v1149 = vsub.f32 %v1060, %v1136
        %v1150 = vsub.f32 %v1065, %v1137
        %v1151 = vsub.f32 %v1070, %v1138
        %v1152 = vsub.f32 %v1075, %v1139
        %v1153 = vsub.f32 %v1080, %v1140
        %v1154 = vsub.f32 %v1085, %v1141
        %v1155 = vmul.f32 %v1142, %v1142
        %v1156 = vmul.f32 %v1143, %v1143
        %v1157 = vmul.f32 %v1144, %v1144
        %v1158 = vmul.f32 %v1145, %v1145
        %v1159 = vmul.f32 %v1146, %v1146
        %v1160 = vmul.f32 %v1147, %v1147
        %v1161 = vmul.f32 %v1148, %v1148
        %v1162 = vmul.f32 %v1149, %v1149
        %v1163 = vmul.f32 %v1150, %v1150
        %v1164 = vmul.f32 %v1151, %v1151
        %v1165 = vmul.f32 %v1152, %v1152
        %v1166 = vmul.f32 %v1153, %v1153
        %v1167 = vmul.f32 %v1154, %v1154
        %v1168 = vsel %vm604, %v1155, 0.0
        %1169 = vadd.xlane.f32.xlu0 %v1168
        %v1170 = vpop.xlane.xlu0 %1169
        %v1171 = vsel %vm604, %v1156, 0.0
        %1172 = vadd.xlane.f32.xlu0 %v1171
        %v1173 = vpop.xlane.xlu0 %1172
        %v1174 = vsel %vm604, %v1157, 0.0
        %1175 = vadd.xlane.f32.xlu0 %v1174
        %v1176 = vpop.xlane.xlu0 %1175
        %v1177 = vsel %vm604, %v1158, 0.0
        %1178 = vadd.xlane.f32.xlu0 %v1177
        %v1179 = vpop.xlane.xlu0 %1178
        %v1180 = vsel %vm604, %v1159, 0.0
        %1181 = vadd.xlane.f32.xlu0 %v1180
        %v1182 = vpop.xlane.xlu0 %1181
        %v1183 = vsel %vm604, %v1160, 0.0
        %1184 = vadd.xlane.f32.xlu0 %v1183
        %v1185 = vpop.xlane.xlu0 %1184
        %v1186 = vsel %vm604, %v1161, 0.0
        %1187 = vadd.xlane.f32.xlu0 %v1186
        %v1188 = vpop.xlane.xlu0 %1187
        %v1189 = vsel %vm604, %v1162, 0.0
        %1190 = vadd.xlane.f32.xlu0 %v1189
        %v1191 = vpop.xlane.xlu0 %1190
        %v1192 = vsel %vm604, %v1163, 0.0
        %1193 = vadd.xlane.f32.xlu0 %v1192
        %v1194 = vpop.xlane.xlu0 %1193
        %v1195 = vsel %vm604, %v1164, 0.0
        %1196 = vadd.xlane.f32.xlu0 %v1195
        %v1197 = vpop.xlane.xlu0 %1196
        %v1198 = vsel %vm604, %v1165, 0.0
        %1199 = vadd.xlane.f32.xlu0 %v1198
        %v1200 = vpop.xlane.xlu0 %1199
        %v1201 = vsel %vm604, %v1166, 0.0
        %1202 = vadd.xlane.f32.xlu0 %v1201
        %v1203 = vpop.xlane.xlu0 %1202
        %v1204 = vsel %vm604, %v1167, 0.0
        %1205 = vadd.xlane.f32.xlu0 %v1204
        %v1206 = vpop.xlane.xlu0 %1205
        %v1207 = vmul.f32 %v1170, %v644
        %v1208 = vmul.f32 %v1173, %v644
        %v1209 = vmul.f32 %v1176, %v644
        %v1210 = vmul.f32 %v1179, %v644
        %v1211 = vmul.f32 %v1182, %v644
        %v1212 = vmul.f32 %v1185, %v644
        %v1213 = vmul.f32 %v1188, %v644
        %v1214 = vmul.f32 %v1191, %v644
        %v1215 = vmul.f32 %v1194, %v644
        %v1216 = vmul.f32 %v1197, %v644
        %v1217 = vmul.f32 %v1200, %v644
        %v1218 = vmul.f32 %v1203, %v644
        %v1219 = vmul.f32 %v1206, %v644
        %v1220 = vadd.f32 %v1207, 1e-05
        %v1221 = vadd.f32 %v1208, 1e-05
        %v1222 = vadd.f32 %v1209, 1e-05
        %v1223 = vadd.f32 %v1210, 1e-05
        %v1224 = vadd.f32 %v1211, 1e-05
        %v1225 = vadd.f32 %v1212, 1e-05
        %v1226 = vadd.f32 %v1213, 1e-05
        %v1227 = vadd.f32 %v1214, 1e-05
        %v1228 = vadd.f32 %v1215, 1e-05
        %v1229 = vadd.f32 %v1216, 1e-05
        %v1230 = vadd.f32 %v1217, 1e-05
        %v1231 = vadd.f32 %v1218, 1e-05
        %v1232 = vadd.f32 %v1219, 1e-05
        %v1233 = vrsqrt.pop %v1220
        %v1234 = vrsqrt.pop %v1221
        %v1235 = vrsqrt.pop %v1222
        %v1236 = vrsqrt.pop %v1223
        %v1237 = vrsqrt.pop %v1224
        %v1238 = vrsqrt.pop %v1225
        %v1239 = vrsqrt.pop %v1226
        %v1240 = vrsqrt.pop %v1227
        %v1241 = vrsqrt.pop %v1228
        %v1242 = vrsqrt.pop %v1229
        %v1243 = vrsqrt.pop %v1230
        %v1244 = vrsqrt.pop %v1231
        %v1245 = vrsqrt.pop %v1232
        %v1246 = vmul.f32 %v1142, %v1233
        %v1247 = vmul.f32 %v1143, %v1234
        %v1248 = vmul.f32 %v1144, %v1235
        %v1249 = vmul.f32 %v1145, %v1236
        %v1250 = vmul.f32 %v1146, %v1237
        %v1251 = vmul.f32 %v1147, %v1238
        %v1252 = vmul.f32 %v1148, %v1239
        %v1253 = vmul.f32 %v1149, %v1240
        %v1254 = vmul.f32 %v1150, %v1241
        %v1255 = vmul.f32 %v1151, %v1242
        %v1256 = vmul.f32 %v1152, %v1243
        %v1257 = vmul.f32 %v1153, %v1244
        %v1258 = vmul.f32 %v1154, %v1245
        %v1260 = vlaneseq
        %v1261 = vshrl.u32 %v1260, 7
        %v1262 = vsub.s32 0, %v1261
        %v1263 = vrot.slane %v1088, %v1262
        %v1265 = vmul.f32 %v1246, %v1263
        %v1266 = vmul.f32 %v1247, %v1263
        %v1267 = vmul.f32 %v1248, %v1263
        %v1268 = vmul.f32 %v1249, %v1263
        %v1269 = vmul.f32 %v1250, %v1263
        %v1270 = vmul.f32 %v1251, %v1263
        %v1271 = vmul.f32 %v1252, %v1263
        %v1272 = vmul.f32 %v1253, %v1263
        %v1273 = vmul.f32 %v1254, %v1263
        %v1274 = vmul.f32 %v1255, %v1263
        %v1275 = vmul.f32 %v1256, %v1263
        %v1276 = vmul.f32 %v1257, %v1263
        %v1277 = vmul.f32 %v1258, %v1263
        %v1279 = vlaneseq
        %v1280 = vshrl.u32 %v1279, 7
        %v1281 = vsub.s32 0, %v1280
        %v1282 = vrot.slane %v1089, %v1281
        %v1284 = vadd.f32 %v1265, %v1282
        %v1285 = vadd.f32 %v1266, %v1282
        %v1286 = vadd.f32 %v1267, %v1282
        %v1287 = vadd.f32 %v1268, %v1282
        %v1288 = vadd.f32 %v1269, %v1282
        %v1289 = vadd.f32 %v1270, %v1282
        %v1290 = vadd.f32 %v1271, %v1282
        %v1291 = vadd.f32 %v1272, %v1282
        %v1292 = vadd.f32 %v1273, %v1282
        %v1293 = vadd.f32 %v1274, %v1282
        %v1294 = vadd.f32 %v1275, %v1282
        %v1295 = vadd.f32 %v1276, %v1282
        %v1296 = vadd.f32 %v1277, %v1282
        %v1297 = vsub.f32 0.0, %v1284
        %v1298 = vsub.f32 0.0, %v1285
        %v1299 = vsub.f32 0.0, %v1286
        %v1300 = vsub.f32 0.0, %v1287
        %v1301 = vsub.f32 0.0, %v1288
        %v1302 = vsub.f32 0.0, %v1289
        %v1303 = vsub.f32 0.0, %v1290
        %v1304 = vsub.f32 0.0, %v1291
        %v1305 = vsub.f32 0.0, %v1292
        %v1306 = vsub.f32 0.0, %v1293
        %v1307 = vsub.f32 0.0, %v1294
        %v1308 = vsub.f32 0.0, %v1295
        %v1309 = vsub.f32 0.0, %v1296
        %v1310 = vmul.f32 %v1297, 1.442695
        %v1311 = vpow.pop %v1310
        %v1312 = vmul.f32 %v1298, 1.442695
        %v1313 = vpow.pop %v1312
        %v1314 = vmul.f32 %v1299, 1.442695
        %v1315 = vpow.pop %v1314
        %v1316 = vmul.f32 %v1300, 1.442695
        %v1317 = vpow.pop %v1316
        %v1318 = vmul.f32 %v1301, 1.442695
        %v1319 = vpow.pop %v1318
        %v1320 = vmul.f32 %v1302, 1.442695
        %v1321 = vpow.pop %v1320
        %v1322 = vmul.f32 %v1303, 1.442695
        %v1323 = vpow.pop %v1322
        %v1324 = vmul.f32 %v1304, 1.442695
        %v1325 = vpow.pop %v1324
        %v1326 = vmul.f32 %v1305, 1.442695
        %v1327 = vpow.pop %v1326
        %v1328 = vmul.f32 %v1306, 1.442695
        %v1329 = vpow.pop %v1328
        %v1330 = vmul.f32 %v1307, 1.442695
        %v1331 = vpow.pop %v1330
        %v1332 = vmul.f32 %v1308, 1.442695
        %v1333 = vpow.pop %v1332
        %v1334 = vmul.f32 %v1309, 1.442695
        %v1335 = vpow.pop %v1334
        %v1336 = vadd.f32 %v1311, 1.0
        %v1337 = vadd.f32 %v1313, 1.0
        %v1338 = vadd.f32 %v1315, 1.0
        %v1339 = vadd.f32 %v1317, 1.0
        %v1340 = vadd.f32 %v1319, 1.0
        %v1341 = vadd.f32 %v1321, 1.0
        %v1342 = vadd.f32 %v1323, 1.0
        %v1343 = vadd.f32 %v1325, 1.0
        %v1344 = vadd.f32 %v1327, 1.0
        %v1345 = vadd.f32 %v1329, 1.0
        %v1346 = vadd.f32 %v1331, 1.0
        %v1347 = vadd.f32 %v1333, 1.0
        %v1348 = vadd.f32 %v1335, 1.0
        %v1349 = vrcp.pop %v1336
        %v1350 = vmul.f32 1.0, %v1349
        %v1351 = vrcp.pop %v1337
        %v1352 = vmul.f32 1.0, %v1351
        %v1353 = vrcp.pop %v1338
        %v1354 = vmul.f32 1.0, %v1353
        %v1355 = vrcp.pop %v1339
        %v1356 = vmul.f32 1.0, %v1355
        %v1357 = vrcp.pop %v1340
        %v1358 = vmul.f32 1.0, %v1357
        %v1359 = vrcp.pop %v1341
        %v1360 = vmul.f32 1.0, %v1359
        %v1361 = vrcp.pop %v1342
        %v1362 = vmul.f32 1.0, %v1361
        %v1363 = vrcp.pop %v1343
        %v1364 = vmul.f32 1.0, %v1363
        %v1365 = vrcp.pop %v1344
        %v1366 = vmul.f32 1.0, %v1365
        %v1367 = vrcp.pop %v1345
        %v1368 = vmul.f32 1.0, %v1367
        %v1369 = vrcp.pop %v1346
        %v1370 = vmul.f32 1.0, %v1369
        %v1371 = vrcp.pop %v1347
        %v1372 = vmul.f32 1.0, %v1371
        %v1373 = vrcp.pop %v1348
        %v1374 = vmul.f32 1.0, %v1373
        %v1375 = vmul.f32 %v1284, %v1350
        %v1376 = vmul.f32 %v1285, %v1352
        %v1377 = vmul.f32 %v1286, %v1354
        %v1378 = vmul.f32 %v1287, %v1356
        %v1379 = vmul.f32 %v1288, %v1358
        %v1380 = vmul.f32 %v1289, %v1360
        %v1381 = vmul.f32 %v1290, %v1362
        %v1382 = vmul.f32 %v1291, %v1364
        %v1383 = vmul.f32 %v1292, %v1366
        %v1384 = vmul.f32 %v1293, %v1368
        %v1385 = vmul.f32 %v1294, %v1370
        %v1386 = vmul.f32 %v1295, %v1372
        %v1387 = vmul.f32 %v1296, %v1374
        %v1388 = vld [vmem:[%s9] sm:$0xff]
        %v1389 = vld [vmem:[%s9 + $0x8] sm:$0xff]
        %v1390 = vld [vmem:[%s9 + $0x10] sm:$0xff]
        %v1391 = vld [vmem:[%s9 + $0x18] sm:$0xff]
        %v1392 = vld [vmem:[%s9 + $0x20] sm:$0xff]
        %v1393 = vld [vmem:[%s9 + $0x28] sm:$0xff]
        %v1394 = vld [vmem:[%s9 + $0x30] sm:$0xff]
        %v1395 = vld [vmem:[%s9 + $0x38] sm:$0xff]
        %v1396 = vld [vmem:[%s10] sm:$0x1]
        %v1398 = vlaneseq
        %v1399 = vshrl.u32 %v1398, 7
        %v1400 = vsub.s32 0, %v1399
        %v1401 = vrot.slane %v1396, %v1400
        %v1404 = vsel %vm604, %v1375, 0
        %v1407 = vsel %vm604, %v1376, 0
        %v1410 = vsel %vm604, %v1377, 0
        %v1413 = vsel %vm604, %v1378, 0
        %v1416 = vsel %vm604, %v1379, 0
        %v1419 = vsel %vm604, %v1380, 0
        %v1422 = vsel %vm604, %v1381, 0
        %v1425 = vsel %vm604, %v1382, 0
        %v1428 = vsel %vm604, %v1383, 0
        %v1431 = vsel %vm604, %v1384, 0
        %v1434 = vsel %vm604, %v1385, 0
        %v1437 = vsel %vm604, %v1386, 0
        %v1440 = vsel %vm604, %v1387, 0
        %1442 = vmatprep.subr.mxu0 0.0
        %1443 = vmatpush1.msra.mxu0 %v1388
        %1444 = vmatprep.subr.mxu0 0.0
        %1445 = vmatpush1.msra.mxu0 %v1389
        %1446 = vmatprep.subr.mxu0 0.0
        %1447 = vmatpush1.msra.mxu0 %v1390
        %1448 = vmatprep.subr.mxu0 0.0
        %1449 = vmatpush1.msra.mxu0 %v1391
        %1450 = vmatprep.subr.mxu0 0.0
        %1451 = vmatpush1.msra.mxu0 %v1392
        %1452 = vmatprep.subr.mxu0 0.0
        %1453 = vmatpush1.msra.mxu0 %v1393
        %1454 = vmatprep.subr.mxu0 0.0
        %1455 = vmatpush1.msra.mxu0 %v1394
        %1456 = vmatprep.subr.mxu0 0.0
        %1457 = vmatpush1.msra.mxu0 %v1395
        %1458 = vmatprep.subr.mxu0 0.0
        %1459 = vmatpush1.msra.mxu0 0.0
        %1460 = vmatprep.subr.mxu0 0.0
        %1461 = vmatpush1.msra.mxu0 0.0
        %1462 = vmatprep.subr.mxu0 0.0
        %1463 = vmatpush1.msra.mxu0 0.0
        %1464 = vmatprep.subr.mxu0 0.0
        %1465 = vmatpush1.msra.mxu0 0.0
        %1466 = vmatprep.subr.mxu0 0.0
        %1467 = vmatpush1.msra.mxu0 0.0
        %1468 = vmatprep.subr.mxu0 0.0
        %1469 = vmatpush1.msra.mxu0 0.0
        %1470 = vmatprep.subr.mxu0 0.0
        %1471 = vmatpush1.msra.mxu0 0.0
        %1472 = vmatprep.subr.mxu0 0.0
        %1473 = vmatpush1.msra.mxu0 0.0
        %1474 = vmatprep.subr.mxu0 0.0
        %1475 = vmatpush1.msra.mxu0 0.0
        %1476 = vmatprep.subr.mxu0 0.0
        %1477 = vmatpush1.msra.mxu0 0.0
        %1478 = vmatprep.subr.mxu0 0.0
        %1479 = vmatpush1.msra.mxu0 0.0
        %1480 = vmatprep.subr.mxu0 0.0
        %1481 = vmatpush1.msra.mxu0 0.0
        %1482 = vmatprep.subr.mxu0 0.0
        %1483 = vmatpush1.msra.mxu0 0.0
        %1484 = vmatprep.subr.mxu0 0.0
        %1485 = vmatpush1.msra.mxu0 0.0
        %1486 = vmatprep.subr.mxu0 0.0
        %1487 = vmatpush1.msra.mxu0 0.0
        %1488 = vmatprep.subr.mxu0 0.0
        %1489 = vmatpush1.msra.mxu0 0.0
        %1490 = vmatprep.subr.mxu0 0.0
        %1491 = vmatpush1.msra.mxu0 0.0
        %1492 = vmatprep.subr.mxu0 0.0
        %1493 = vmatpush1.msra.mxu0 0.0
        %1494 = vmatprep.subr.mxu0 0.0
        %1495 = vmatpush1.msra.mxu0 0.0
        %1496 = vmatprep.subr.mxu0 0.0
        %1497 = vmatpush1.msra.mxu0 0.0
        %1498 = vmatprep.subr.mxu0 0.0
        %1499 = vmatpush1.msra.mxu0 0.0
        %1500 = vmatprep.subr.mxu0 0.0
        %1501 = vmatpush1.msra.mxu0 0.0
        %1502 = vmatprep.subr.mxu0 0.0
        %1503 = vmatpush1.msra.mxu0 0.0
        %1504 = vmatprep.subr.mxu0 0.0
        %1505 = vmatpush1.msra.mxu0 0.0
        %1506 = vmatprep.mubr.f32.mxu0 0.0
        %1507 = vmatmul.mubr.f32.gmra.mrb[0].mxu0 %v1404
        %v1508 = vpop.f32.mrb[0].mxu0
        %v1509 = vadd.f32 %v1401, %v1508
        %v1510 = vpop.f32.mrb[0].mxu0
        %1511 = vmatprep.mubr.f32.mxu0 0.0
        %1512 = vmatmul.mubr.f32.gmra.mrb[0].mxu0 %v1407
        %v1513 = vpop.f32.mrb[0].mxu0
        %v1514 = vadd.f32 %v1401, %v1513
        %v1515 = vpop.f32.mrb[0].mxu0
        %1516 = vmatprep.mubr.f32.mxu0 0.0
        %1517 = vmatmul.mubr.f32.gmra.mrb[0].mxu0 %v1410
        %v1518 = vpop.f32.mrb[0].mxu0
        %v1519 = vadd.f32 %v1401, %v1518
        %v1520 = vpop.f32.mrb[0].mxu0
        %1521 = vmatprep.mubr.f32.mxu0 0.0
        %1522 = vmatmul.mubr.f32.gmra.mrb[0].mxu0 %v1413
        %v1523 = vpop.f32.mrb[0].mxu0
        %v1524 = vadd.f32 %v1401, %v1523
        %v1525 = vpop.f32.mrb[0].mxu0
        %1526 = vmatprep.mubr.f32.mxu0 0.0
        %1527 = vmatmul.mubr.f32.gmra.mrb[0].mxu0 %v1416
        %v1528 = vpop.f32.mrb[0].mxu0
        %v1529 = vadd.f32 %v1401, %v1528
        %v1530 = vpop.f32.mrb[0].mxu0
        %1531 = vmatprep.mubr.f32.mxu0 0.0
        %1532 = vmatmul.mubr.f32.gmra.mrb[0].mxu0 %v1419
        %v1533 = vpop.f32.mrb[0].mxu0
        %v1534 = vadd.f32 %v1401, %v1533
        %v1535 = vpop.f32.mrb[0].mxu0
        %1536 = vmatprep.mubr.f32.mxu0 0.0
        %1537 = vmatmul.mubr.f32.gmra.mrb[0].mxu0 %v1422
        %v1538 = vpop.f32.mrb[0].mxu0
        %v1539 = vadd.f32 %v1401, %v1538
        %v1540 = vpop.f32.mrb[0].mxu0
        %1541 = vmatprep.mubr.f32.mxu0 0.0
        %1542 = vmatmul.mubr.f32.gmra.mrb[0].mxu0 %v1425
        %v1543 = vpop.f32.mrb[0].mxu0
        %v1544 = vadd.f32 %v1401, %v1543
        %v1545 = vpop.f32.mrb[0].mxu0
        %1546 = vmatprep.mubr.f32.mxu0 0.0
        %1547 = vmatmul.mubr.f32.gmra.mrb[0].mxu0 %v1428
        %v1548 = vpop.f32.mrb[0].mxu0
        %v1549 = vadd.f32 %v1401, %v1548
        %v1550 = vpop.f32.mrb[0].mxu0
        %1551 = vmatprep.mubr.f32.mxu0 0.0
        %1552 = vmatmul.mubr.f32.gmra.mrb[0].mxu0 %v1431
        %v1553 = vpop.f32.mrb[0].mxu0
        %v1554 = vadd.f32 %v1401, %v1553
        %v1555 = vpop.f32.mrb[0].mxu0
        %1556 = vmatprep.mubr.f32.mxu0 0.0
        %1557 = vmatmul.mubr.f32.gmra.mrb[0].mxu0 %v1434
        %v1558 = vpop.f32.mrb[0].mxu0
        %v1559 = vadd.f32 %v1401, %v1558
        %v1560 = vpop.f32.mrb[0].mxu0
        %1561 = vmatprep.mubr.f32.mxu0 0.0
        %1562 = vmatmul.mubr.f32.gmra.mrb[0].mxu0 %v1437
        %v1563 = vpop.f32.mrb[0].mxu0
        %v1564 = vadd.f32 %v1401, %v1563
        %v1565 = vpop.f32.mrb[0].mxu0
        %1566 = vmatprep.mubr.f32.mxu0 0.0
        %1567 = vmatmul.mubr.f32.gmra.mrb[0].mxu0 %v1440
        %v1568 = vpop.f32.mrb[0].mxu0
        %v1569 = vadd.f32 %v1401, %v1568
        %v1570 = vpop.f32.mrb[0].mxu0
        %1571 = vdwg.mxu0
        %v1572 = vtanh.pop %v1509
        %v1573 = vtanh.pop %v1514
        %v1574 = vtanh.pop %v1519
        %v1575 = vtanh.pop %v1524
        %v1576 = vtanh.pop %v1529
        %v1577 = vtanh.pop %v1534
        %v1578 = vtanh.pop %v1539
        %v1579 = vtanh.pop %v1544
        %v1580 = vtanh.pop %v1549
        %v1581 = vtanh.pop %v1554
        %v1582 = vtanh.pop %v1559
        %v1583 = vtanh.pop %v1564
        %v1584 = vtanh.pop %v1569
        %vm1585 = vcmask 130048
        %1586 = vst.msk [vmem:[%s388] sm:$0xff] %vm1585, %v1572
        %1587 = vst.msk [vmem:[%s388 + $0x8] sm:$0xff] %vm1585, %v1573
        %1588 = vst.msk [vmem:[%s388 + $0x10] sm:$0xff] %vm1585, %v1574
        %1589 = vst.msk [vmem:[%s388 + $0x18] sm:$0xff] %vm1585, %v1575
        %1590 = vst.msk [vmem:[%s388 + $0x20] sm:$0xff] %vm1585, %v1576
        %1591 = vst.msk [vmem:[%s388 + $0x28] sm:$0xff] %vm1585, %v1577
        %1592 = vst.msk [vmem:[%s388 + $0x30] sm:$0xff] %vm1585, %v1578
        %1593 = vst.msk [vmem:[%s388 + $0x38] sm:$0xff] %vm1585, %v1579
        %1594 = vst.msk [vmem:[%s388 + $0x40] sm:$0xff] %vm1585, %v1580
        %1595 = vst.msk [vmem:[%s388 + $0x48] sm:$0xff] %vm1585, %v1581
        %1596 = vst.msk [vmem:[%s388 + $0x50] sm:$0xff] %vm1585, %v1582
        %1597 = vst.msk [vmem:[%s388 + $0x58] sm:$0xff] %vm1585, %v1583
        %1598 = vst.msk [vmem:[%s388 + $0x60] sm:$0xff] %vm1585, %v1584
        %s1599 = sand.u32 %s266, 1
        %s1600 = sand.u32 %s266, 1
        %s1601 = smul.addr %s1600, 104
        %s1602 = scalar_lea.vmem [#allocation2], %s1601
        // Predicated region
        $region65: #{tpu_custom_call.1} parent=63 // pred_check
          %p1603 = pneg %p276
        $region66: #{tpu_custom_call.1} parent=63 // pred_check_branch
          %1605 = sbr.rel (%p1603) target = $region68
        $region67: #{tpu_custom_call.1} parent=63 // pred_region
          %s1606 = smul.u32 13, %s22
          %s1607 = ssub.s32 25, %s1606
          %p1608 = scmp.lt.s32.totalorder %s1607, 13
          %s1609 = scalar_select %p1608, %s1607, 13
          %s1610 = smul.u32 128, %s1609
          %p1611 = scmp.ne.s32.totalorder 0, %s1610
          %s1612 = smul.addr %s1606, 8
          %s1613 = scalar_lea.vmem %s11, %s1612
          // Predicated region
          $region69: #{tpu_custom_call.1} parent=67 // pred_check
            %p1614 = pneg %p1611
          $region70: #{tpu_custom_call.1} parent=67 // pred_check_branch
            %1616 = sbr.rel (%p1614) target = $region72
          $region71: #{tpu_custom_call.1} parent=67 // pred_region
            // Predicated region
            $region73: #{tpu_custom_call.1} parent=71 // pred_check
              _
            $region74: #{tpu_custom_call.1} parent=71 // pred_check_branch
              %1618 = sbr.rel (0) target = $region76
            $region75: #{tpu_custom_call.1} parent=71 // pred_region
              // Predicated region
              $region95: #{tpu_custom_call.1} parent=75 // pred_check
                _
              $region96: #{tpu_custom_call.1} parent=75 // pred_check_branch
                %1692 = sbr.rel (0) target = $region98
              $region97: #{tpu_custom_call.1} parent=75 // pred_region
                %s1693 = sdiv.u32.pop %s1609, 13
                %s1694 = srem.u32.pop %s1609, 13
                // While loop
                $region99: #{tpu_custom_call.1} parent=97 // loop_pre_header
                  _
                $region100: #{tpu_custom_call.1} parent=97 // loop_header
                  %s1696 = sphi 0, %s1698
                  %p1697 = scmp.ge.s32.totalorder %s1696, %s1693
                  %s1701 = sphi 0, %s1732
                  %s1702 = sphi %s1602, %s1735
                  %s1703 = sphi %s1613, %s1736
                $region101: #{tpu_custom_call.1} parent=97 // loop_header_branch
                  %1700 = sbr.rel (%p1697) target = $region105
                $region102: #{tpu_custom_call.1} parent=97 // loop_body
                  %v1704 = vld [vmem:[%s1702] sm:$0xff]
                  %1705 = vst [vmem:[%s1703] sm:$0xff] %v1704
                  %v1706 = vld [vmem:[%s1702 + $0x8] sm:$0xff]
                  %1707 = vst [vmem:[%s1703 + $0x8] sm:$0xff] %v1706
                  %v1708 = vld [vmem:[%s1702 + $0x10] sm:$0xff]
                  %1709 = vst [vmem:[%s1703 + $0x10] sm:$0xff] %v1708
                  %v1710 = vld [vmem:[%s1702 + $0x18] sm:$0xff]
                  %1711 = vst [vmem:[%s1703 + $0x18] sm:$0xff] %v1710
                  %v1712 = vld [vmem:[%s1702 + $0x20] sm:$0xff]
                  %1713 = vst [vmem:[%s1703 + $0x20] sm:$0xff] %v1712
                  %v1714 = vld [vmem:[%s1702 + $0x28] sm:$0xff]
                  %1715 = vst [vmem:[%s1703 + $0x28] sm:$0xff] %v1714
                  %v1716 = vld [vmem:[%s1702 + $0x30] sm:$0xff]
                  %1717 = vst [vmem:[%s1703 + $0x30] sm:$0xff] %v1716
                  %v1718 = vld [vmem:[%s1702 + $0x38] sm:$0xff]
                  %1719 = vst [vmem:[%s1703 + $0x38] sm:$0xff] %v1718
                  %v1720 = vld [vmem:[%s1702 + $0x40] sm:$0xff]
                  %1721 = vst [vmem:[%s1703 + $0x40] sm:$0xff] %v1720
                  %v1722 = vld [vmem:[%s1702 + $0x48] sm:$0xff]
                  %1723 = vst [vmem:[%s1703 + $0x48] sm:$0xff] %v1722
                  %v1724 = vld [vmem:[%s1702 + $0x50] sm:$0xff]
                  %1725 = vst [vmem:[%s1703 + $0x50] sm:$0xff] %v1724
                  %v1726 = vld [vmem:[%s1702 + $0x58] sm:$0xff]
                  %1727 = vst [vmem:[%s1703 + $0x58] sm:$0xff] %v1726
                  %v1728 = vld [vmem:[%s1702 + $0x60] sm:$0xff]
                  %1729 = vst [vmem:[%s1703 + $0x60] sm:$0xff] %v1728
                  %s1730 = sadd.s32 1, %s1701
                  %p1731 = scmp.ge.s32.totalorder %s1730, %s1693
                  %s1732 = scalar_select %p1731, 0, %s1730
                  %s1733 = smul.u32 %s1732, 104
                  %s1734 = smul.u32 %s1732, 104
                  %s1735 = scalar_lea.vmem %s1602, %s1733 [#allocation2]
                  %s1736 = scalar_lea.vmem %s1613, %s1734
                $region103: #{tpu_custom_call.1} parent=97 // loop_footer
                  %s1698 = sadd.s32 %s1696, 1
                $region104: #{tpu_custom_call.1} parent=97 // loop_footer_branch
                  %1695 = sbr.rel target = $region100
                $region105: #{tpu_custom_call.1} parent=97 // loop_exit
                  _
                %s1737 = sdiv.u32.pop %s1609, 13
                %s1738 = srem.u32.pop %s1609, 13
                %s1739 = smul.u32 %s1737, 13
                %s1740 = smul.u32 8, %s1739
                %s1741 = scalar_lea.vmem %s1602, %s1740 [#allocation2]
                %s1742 = smul.u32 8, %s1739
                %s1743 = scalar_lea.vmem %s1613, %s1742
                // While loop
                $region106: #{tpu_custom_call.1} parent=97 // loop_pre_header
                  _
                $region107: #{tpu_custom_call.1} parent=97 // loop_header
                  %s1745 = sphi 0, %s1747
                  %p1746 = scmp.ge.s32.totalorder %s1745, %s1738
                  %s1750 = sphi 0, %s1757
                  %s1751 = sphi %s1741, %s1760
                  %s1752 = sphi %s1743, %s1761
                $region108: #{tpu_custom_call.1} parent=97 // loop_header_branch
                  %1749 = sbr.rel (%p1746) target = $region112
                $region109: #{tpu_custom_call.1} parent=97 // loop_body
                  %v1753 = vld [vmem:[%s1751] sm:$0xff]
                  %1754 = vst [vmem:[%s1752] sm:$0xff] %v1753
                  %s1755 = sadd.s32 1, %s1750
                  %p1756 = scmp.ge.s32.totalorder %s1755, %s1738
                  %s1757 = scalar_select %p1756, 0, %s1755
                  %s1758 = smul.u32 %s1757, 8
                  %s1759 = smul.u32 %s1757, 8
                  %s1760 = scalar_lea.vmem %s1741, %s1758 [#allocation2]
                  %s1761 = scalar_lea.vmem %s1743, %s1759
                $region110: #{tpu_custom_call.1} parent=97 // loop_footer
                  %s1747 = sadd.s32 %s1745, 1
                $region111: #{tpu_custom_call.1} parent=97 // loop_footer_branch
                  %1744 = sbr.rel target = $region107
                $region112: #{tpu_custom_call.1} parent=97 // loop_exit
                  _
              $region98: #{tpu_custom_call.1} parent=75 // pred_fallthru
                _
              // Predicated region
              $region113: #{tpu_custom_call.1} parent=75 // pred_check
                _
              $region114: #{tpu_custom_call.1} parent=75 // pred_check_branch
                %1763 = sbr.rel target = $region116
              $region115: #{tpu_custom_call.1} parent=75 // pred_region
                _
              $region116: #{tpu_custom_call.1} parent=75 // pred_fallthru
                _
            $region76: #{tpu_custom_call.1} parent=71 // pred_fallthru
              _
            // Predicated region
            $region77: #{tpu_custom_call.1} parent=71 // pred_check
              _
            $region78: #{tpu_custom_call.1} parent=71 // pred_check_branch
              %1620 = sbr.rel target = $region80
            $region79: #{tpu_custom_call.1} parent=71 // pred_region
              %s1622 = sdiv.u32.pop %s1609, 13
              %s1623 = srem.u32.pop %s1609, 13
              // While loop
              $region81: #{tpu_custom_call.1} parent=79 // loop_pre_header
                _
              $region82: #{tpu_custom_call.1} parent=79 // loop_header
                %s1625 = sphi 0, %s1627
                %p1626 = scmp.ge.s32.totalorder %s1625, %s1622
                %s1630 = sphi 0, %s1661
                %s1631 = sphi %s1602, %s1664
                %s1632 = sphi %s1613, %s1665
              $region83: #{tpu_custom_call.1} parent=79 // loop_header_branch
                %1629 = sbr.rel (%p1626) target = $region87
              $region84: #{tpu_custom_call.1} parent=79 // loop_body
                %v1633 = vld [vmem:[%s1631] sm:$0xff]
                %1634 = vst [vmem:[%s1632] sm:$0xff] %v1633
                %v1635 = vld [vmem:[%s1631 + $0x8] sm:$0xff]
                %1636 = vst [vmem:[%s1632 + $0x8] sm:$0xff] %v1635
                %v1637 = vld [vmem:[%s1631 + $0x10] sm:$0xff]
                %1638 = vst [vmem:[%s1632 + $0x10] sm:$0xff] %v1637
                %v1639 = vld [vmem:[%s1631 + $0x18] sm:$0xff]
                %1640 = vst [vmem:[%s1632 + $0x18] sm:$0xff] %v1639
                %v1641 = vld [vmem:[%s1631 + $0x20] sm:$0xff]
                %1642 = vst [vmem:[%s1632 + $0x20] sm:$0xff] %v1641
                %v1643 = vld [vmem:[%s1631 + $0x28] sm:$0xff]
                %1644 = vst [vmem:[%s1632 + $0x28] sm:$0xff] %v1643
                %v1645 = vld [vmem:[%s1631 + $0x30] sm:$0xff]
                %1646 = vst [vmem:[%s1632 + $0x30] sm:$0xff] %v1645
                %v1647 = vld [vmem:[%s1631 + $0x38] sm:$0xff]
                %1648 = vst [vmem:[%s1632 + $0x38] sm:$0xff] %v1647
                %v1649 = vld [vmem:[%s1631 + $0x40] sm:$0xff]
                %1650 = vst [vmem:[%s1632 + $0x40] sm:$0xff] %v1649
                %v1651 = vld [vmem:[%s1631 + $0x48] sm:$0xff]
                %1652 = vst [vmem:[%s1632 + $0x48] sm:$0xff] %v1651
                %v1653 = vld [vmem:[%s1631 + $0x50] sm:$0xff]
                %1654 = vst [vmem:[%s1632 + $0x50] sm:$0xff] %v1653
                %v1655 = vld [vmem:[%s1631 + $0x58] sm:$0xff]
                %1656 = vst [vmem:[%s1632 + $0x58] sm:$0xff] %v1655
                %v1657 = vld [vmem:[%s1631 + $0x60] sm:$0xff]
                %1658 = vst [vmem:[%s1632 + $0x60] sm:$0xff] %v1657
                %s1659 = sadd.s32 1, %s1630
                %p1660 = scmp.ge.s32.totalorder %s1659, %s1622
                %s1661 = scalar_select %p1660, 0, %s1659
                %s1662 = smul.u32 %s1661, 104
                %s1663 = smul.u32 %s1661, 104
                %s1664 = scalar_lea.vmem %s1602, %s1662 [#allocation2]
                %s1665 = scalar_lea.vmem %s1613, %s1663
              $region85: #{tpu_custom_call.1} parent=79 // loop_footer
                %s1627 = sadd.s32 %s1625, 1
              $region86: #{tpu_custom_call.1} parent=79 // loop_footer_branch
                %1624 = sbr.rel target = $region82
              $region87: #{tpu_custom_call.1} parent=79 // loop_exit
                _
              %s1666 = sdiv.u32.pop %s1609, 13
              %s1667 = srem.u32.pop %s1609, 13
              %s1668 = smul.u32 %s1666, 13
              %s1669 = smul.u32 8, %s1668
              %s1670 = scalar_lea.vmem %s1602, %s1669 [#allocation2]
              %s1671 = smul.u32 8, %s1668
              %s1672 = scalar_lea.vmem %s1613, %s1671
              // While loop
              $region88: #{tpu_custom_call.1} parent=79 // loop_pre_header
                _
              $region89: #{tpu_custom_call.1} parent=79 // loop_header
                %s1674 = sphi 0, %s1676
                %p1675 = scmp.ge.s32.totalorder %s1674, %s1667
                %s1679 = sphi 0, %s1686
                %s1680 = sphi %s1670, %s1689
                %s1681 = sphi %s1672, %s1690
              $region90: #{tpu_custom_call.1} parent=79 // loop_header_branch
                %1678 = sbr.rel (%p1675) target = $region94
              $region91: #{tpu_custom_call.1} parent=79 // loop_body
                %v1682 = vld [vmem:[%s1680] sm:$0xff]
                %1683 = vst [vmem:[%s1681] sm:$0xff] %v1682
                %s1684 = sadd.s32 1, %s1679
                %p1685 = scmp.ge.s32.totalorder %s1684, %s1667
                %s1686 = scalar_select %p1685, 0, %s1684
                %s1687 = smul.u32 %s1686, 8
                %s1688 = smul.u32 %s1686, 8
                %s1689 = scalar_lea.vmem %s1670, %s1687 [#allocation2]
                %s1690 = scalar_lea.vmem %s1672, %s1688
              $region92: #{tpu_custom_call.1} parent=79 // loop_footer
                %s1676 = sadd.s32 %s1674, 1
              $region93: #{tpu_custom_call.1} parent=79 // loop_footer_branch
                %1673 = sbr.rel target = $region89
              $region94: #{tpu_custom_call.1} parent=79 // loop_exit
                _
            $region80: #{tpu_custom_call.1} parent=71 // pred_fallthru
              _
          $region72: #{tpu_custom_call.1} parent=67 // pred_fallthru
            _
          %1764 = vnop
        $region68: #{tpu_custom_call.1} parent=63 // pred_fallthru
          _
      $region64: #{tpu_custom_call.1} parent=5 // pred_fallthru
        _
      %p1765 = scmp.le.s32.totalorder 2, %s17
      // Predicated region
      $region117: #{tpu_custom_call.1} parent=5 // pred_check
        %p1766 = pneg %p1765
      $region118: #{tpu_custom_call.1} parent=5 // pred_check_branch
        %1768 = sbr.rel (%p1766) target = $region120
      $region119: #{tpu_custom_call.1} parent=5 // pred_region
        %s1769 = ssub.s32 %s17, 2
        // Predicated region
        $region121: #{tpu_custom_call.1} parent=119 // pred_check
          %p1770 = pneg %p282
        $region122: #{tpu_custom_call.1} parent=119 // pred_check_branch
          %1772 = sbr.rel (%p1770) target = $region124
        $region123: #{tpu_custom_call.1} parent=119 // pred_region
          %s1773 = sand.u32 %s267, 1
          %s1774 = sand.u32 %s267, 1
          %s1775 = smul.addr %s1774, 104
          %s1776 = scalar_lea.vmem [#allocation2], %s1775
        $region124: #{tpu_custom_call.1} parent=119 // pred_fallthru
          _
      $region120: #{tpu_custom_call.1} parent=5 // pred_fallthru
        _
    $region6: #{tpu_custom_call.1} parent=1 // loop_footer
      %s21 = sadd.s32 1, %s17
    $region7: #{tpu_custom_call.1} parent=1 // loop_footer_branch
      %16 = sbr.rel target = $region3
    $region8: #{tpu_custom_call.1} parent=1 // loop_exit
      _

</llo_original>
